<compile_context>
chip_gen: v7x
topology: tpu7x:2x2x1
jax: 0.10.0
libtpu: 0.0.40
codegen_flags: <defaults>
</compile_context>

<pallas_src>
import functools

import jax
import jax.numpy as jnp
from jax import lax
from jax.experimental import pallas as pl
from jax.experimental.pallas import tpu as pltpu


# ------------------------- helpers -------------------------

def _bce_with_logits(x, y):
    # numerically-stable BCEWithLogitsLoss elementwise term
    return jnp.maximum(x, 0.0) - x * y + jnp.log1p(jnp.exp(-jnp.abs(x)))


# ------------------------- Pallas kernel -------------------------

def blanknet_kernel(rows_ref,      # SMEM (2B,) int32 flat gather rows (scalar prefetch)
                    enc_hbm,       # ANY  (B*S, D) encoder output, stays in HBM
                    w1_ref,        # VMEM (2D, H) shared-layer weight (unsplit, K=2D)
                    b1_ref,        # VMEM (1, H)
                    wcat_ref,      # VMEM (H, NPAD) lane-padded fused event|action weight
                    bcat_ref,      # VMEM (1, NPAD)
                    lab_ref,       # VMEM (B, NPAD) lane-padded fused labels
                    out_ref,       # OUT  (B, NPAD) probs; losses in lanes E+A, E+A+1 of row 0
                    slab,          # VMEM (B, 2D) gathered [st | en] slab
                    sem,           # DMA semaphores (2B,)
                    *, n_events, n_actions):
    B, two_d = slab.shape
    d = two_d // 2

    # --- gather phase: issue all 2B row DMAs concurrently (HBM -> VMEM) ---
    # rows[2b]   -> slab[b, :D]   (start-1 token embedding)
    # rows[2b+1] -> slab[b, D:2D] (end+1 token embedding)
    for i in range(2 * B):
        b, j = divmod(i, 2)
        pltpu.make_async_copy(
            enc_hbm.at[pl.ds(rows_ref[i], 1)],             # (1, D) dynamic source row
            slab.at[pl.ds(b, 1), pl.ds(j * d, d)],         # (1, D) destination window
            sem.at[i]).start()
    for i in range(2 * B):
        b, j = divmod(i, 2)
        pltpu.make_async_copy(
            enc_hbm.at[pl.ds(0, 1)],                       # shape-only for wait byte count
            slab.at[pl.ds(b, 1), pl.ds(j * d, d)],
            sem.at[i]).wait()

    # --- shared = ReLU(concat(st, en) @ W1 + b1): single K=2D MXU pass ---
    shared = jnp.maximum(
        jnp.dot(slab[...], w1_ref[...], preferred_element_type=jnp.float32)
        + b1_ref[...], 0.0)                                 # (B, H)

    # --- fused lane-dense classifier head: one (H, NPAD) matmul ---
    logits = (jnp.dot(shared, wcat_ref[...],
                      preferred_element_type=jnp.float32)
              + bcat_ref[...])                              # (B, NPAD)
    probs = 1.0 / (1.0 + jnp.exp(-logits))                  # exact sigmoid

    # --- event_first() losses (padded lanes excluded via masks) ---
    n_total = n_events + n_actions
    lab = lab_ref[...]                                      # (B, NPAD)
    bce = _bce_with_logits(logits, lab)                     # (B, NPAD)
    lane = lax.broadcasted_iota(jnp.int32, bce.shape, 1)
    ev_mask = (lane < n_events).astype(jnp.float32)
    act_mask = jnp.logical_and(lane >= n_events, lane < n_total).astype(jnp.float32)

    # BCEWithLogitsLoss (mean) over events
    loss_event = jnp.sum(bce * ev_mask) * (1.0 / float(B * n_events))

    # disposition-masked action loss; events come first in labcat so column 2
    # is elab[:, 2] (the disposition event) -- invariant of the head fusion order.
    dispo = (lab[:, 2:3] == 1.0).astype(jnp.float32)        # (B, 1)
    cnt = jnp.sum(dispo)
    act_sum = jnp.sum(bce * act_mask * dispo)
    loss_action = jnp.where(cnt > 0.0, act_sum / (cnt * float(n_actions)), 0.0)

    # fold both loss scalars into padded lanes of the single lane-dense output
    row0 = lax.broadcasted_iota(jnp.int32, probs.shape, 0) == 0
    out = jnp.where(jnp.logical_and(row0, lane == n_total), loss_event, probs)
    out = jnp.where(jnp.logical_and(row0, lane == n_total + 1), loss_action, out)
    out_ref[...] = out


# ------------------------- wrapper -------------------------

@jax.jit
def blanknet_forward(tok, enc, w1, b1, we, be, wa, ba, elab, alab):
    B, S, D = enc.shape
    H = w1.shape[1]
    E = we.shape[1]
    A = wa.shape[1]
    n_total = E + A
    # lane-dense head width (multiple of 128, with room for the 2 loss lanes)
    NPAD = ((n_total + 2 + 127) // 128) * 128

    # Flatten encoder output so each gather is a single (1, D) HBM row DMA.
    enc2d = enc.reshape(B * S, D)

    # Flat, clamped gather rows: [2b] = start-1, [2b+1] = end+1 (clamp guards
    # against out-of-bounds token spans -- DMA OOB is not checked in VMEM).
    base = jnp.arange(B, dtype=jnp.int32) * S
    st_row = base + jnp.clip(tok[:, 0].astype(jnp.int32) - 1, 0, S - 1)
    en_row = base + jnp.clip(tok[:, 1].astype(jnp.int32) + 1, 0, S - 1)
    rows = jnp.stack([st_row, en_row], axis=1).reshape(-1)            # (2B,)

    # fuse + lane-pad the two classifier heads and labels to NPAD lanes
    pad = NPAD - n_total
    wcat = jnp.pad(jnp.concatenate([we, wa], axis=1), ((0, 0), (0, pad)))
    bcat = jnp.pad(jnp.concatenate([be, ba], axis=1), ((0, 0), (0, pad)))
    labcat = jnp.pad(jnp.concatenate([elab, alab], axis=1), ((0, 0), (0, pad)))

    def resident(shape):
        return pl.BlockSpec(shape, lambda i, rows_idx: (0, 0))

    grid_spec = pltpu.PrefetchScalarGridSpec(
        num_scalar_prefetch=1,
        grid=(1,),                       # single step: manual batched gather DMAs
        in_specs=[
            pl.BlockSpec(memory_space=pl.ANY),   # enc2d stays in HBM
            resident((2 * D, H)),                # w1 (unsplit)
            resident((1, H)),                    # b1
            resident((H, NPAD)),                 # fused head weight (lane-dense)
            resident((1, NPAD)),                 # fused head bias
            resident((B, NPAD)),                 # fused labels
        ],
        out_specs=pl.BlockSpec((B, NPAD), lambda i, rows_idx: (0, 0)),
        scratch_shapes=[
            pltpu.VMEM((B, 2 * D), jnp.float32),     # [st | en] slab
            pltpu.SemaphoreType.DMA((2 * B,)),       # one sem per row DMA
        ],
    )

    out = pl.pallas_call(
        functools.partial(blanknet_kernel, n_events=E, n_actions=A),
        grid_spec=grid_spec,
        out_shape=jax.ShapeDtypeStruct((B, NPAD), jnp.float32),
        compiler_params=pltpu.CompilerParams(
            dimension_semantics=("arbitrary",),
            vmem_limit_bytes=32 * 1024 * 1024),
    )(rows, enc2d, w1, b1, wcat, bcat, labcat)

    # module returns (loss_event, loss_action, event_probs, action_probs)
    return out[0, n_total], out[0, n_total + 1], out[:, :E], out[:, E:n_total]


# ------------------------- pure-JAX reference -------------------------

def reference(tok, enc, w1, b1, we, be, wa, ba, elab, alab):
    idx = jnp.arange(enc.shape[0])
    st = enc[idx, tok[:, 0] - 1]
    en = enc[idx, tok[:, 1] + 1]
    h1 = jnp.concatenate([st, en], axis=-1)
    shared = jax.nn.relu(h1 @ w1 + b1)
    elog = shared @ we + be
    alog = shared @ wa + ba
    eprob = jax.nn.sigmoid(elog)
    aprob = jax.nn.sigmoid(alog)
    eloss = jnp.mean(_bce_with_logits(elog, elab))
    mask = (elab[:, 2] == 1.0).astype(jnp.float32)
    cnt = jnp.sum(mask)
    a_elem = _bce_with_logits(alog, alab)
    aloss = jnp.where(cnt > 0,
                      jnp.sum(a_elem * mask[:, None]) / (cnt * alab.shape[-1]),
                      0.0)
    return eloss, aloss, eprob, aprob


# ------------------------- main -------------------------

if __name__ == "__main__":
    B, S, D = 4, 16, 128          # batch, seq, BERT hidden
    I = 2 * D                     # config['intermediate_dim'] (use_verbs=False)
    H = 128                       # config['hidden_dim']
    E, A = 8, 8                   # len(vocabs['events']), len(vocabs['actions'])

    key = jax.random.PRNGKey(0)
    ks = jax.random.split(key, 10)

    # synthetic BERT last_hidden_state  (TODO(synk): real BERT not modeled)
    enc = jax.random.normal(ks[0], (B, S, D), jnp.float32)

    # token spans: tok[:,0] in [1, S-1], tok[:,1] in [0, S-2]
    tok0 = jax.random.randint(ks[1], (B, 1), 1, S)
    tok1 = jax.random.randint(ks[2], (B, 1), 0, S - 1)
    tok = jnp.concatenate([tok0, tok1], axis=1).astype(jnp.int32)

    # deterministic synthetic parameters (module __init__ shapes)
    w1 = 0.05 * jax.random.normal(ks[3], (I, H), jnp.float32)
    b1 = 0.05 * jax.random.normal(ks[4], (1, H), jnp.float32)
    we = 0.05 * jax.random.normal(ks[5], (H, E), jnp.float32)
    be = 0.05 * jax.random.normal(ks[6], (1, E), jnp.float32)
    wa = 0.05 * jax.random.normal(ks[7], (H, A), jnp.float32)
    ba = 0.05 * jax.random.normal(ks[8], (1, A), jnp.float32)

    # multi-hot labels; make sure at least one disposition-positive row exists
    elab = (jax.random.uniform(ks[9], (B, E)) > 0.5).astype(jnp.float32)
    elab = elab.at[0, 2].set(1.0)
    alab = (jax.random.uniform(jax.random.PRNGKey(1), (B, A)) > 0.5).astype(jnp.float32)

    out = blanknet_forward(tok, enc, w1, b1, we, be, wa, ba, elab, alab)
    out = jax.block_until_ready(out)

    ref = reference(tok, enc, w1, b1, we, be, wa, ba, elab, alab)
    for got, want in zip(out, ref):
        assert jnp.allclose(got, want, atol=1e-5, rtol=1e-5), (got, want)

    print("KERNEL_OK")
</pallas_src>

<mosaic_0001>
module attributes {stable_mosaic.version = 11 : i64} {
  func.func @blanknet_kernel(%arg0: i32, %arg1: memref<8xi32, #tpu.memory_space<smem>>, %arg2: memref<64x128xf32, #tpu.memory_space<any>>, %arg3: memref<256x128xf32, #tpu.memory_space<vmem>>, %arg4: memref<1x128xf32, #tpu.memory_space<vmem>>, %arg5: memref<128x128xf32, #tpu.memory_space<vmem>>, %arg6: memref<1x128xf32, #tpu.memory_space<vmem>>, %arg7: memref<4x128xf32, #tpu.memory_space<vmem>>, %arg8: memref<4x128xf32, #tpu.memory_space<vmem>>, %arg9: memref<4x256xf32, #tpu.memory_space<vmem>>, %arg10: memref<8x!tpu.dma_semaphore, #tpu.memory_space<semaphore_mem>>) attributes {dimension_semantics = [#tpu.dimension_semantics<arbitrary>], iteration_bounds = array<i64: 1>, scalar_prefetch = 1 : i64, scratch_operands = 2 : i64, tpu.core_type = #tpu.core_type<tc>, window_params = [{}, {pipeline_mode = #tpu.pipeline_mode<synchronous>, transform_indices = @transform_1, window_bounds = array<i64: 256, 128>}, {pipeline_mode = #tpu.pipeline_mode<synchronous>, transform_indices = @transform_2, window_bounds = array<i64: 1, 128>}, {pipeline_mode = #tpu.pipeline_mode<synchronous>, transform_indices = @transform_3, window_bounds = array<i64: 128, 128>}, {pipeline_mode = #tpu.pipeline_mode<synchronous>, transform_indices = @transform_4, window_bounds = array<i64: 1, 128>}, {pipeline_mode = #tpu.pipeline_mode<synchronous>, transform_indices = @transform_5, window_bounds = array<i64: 4, 128>}, {pipeline_mode = #tpu.pipeline_mode<synchronous>, transform_indices = @transform_6, window_bounds = array<i64: 4, 128>}]} {
    %c0 = arith.constant 0 : index
    %0 = memref.load %arg1[%c0] : memref<8xi32, #tpu.memory_space<smem>>
    %c0_i32 = arith.constant 0 : i32
    %c0_i32_0 = arith.constant 0 : i32
    %1 = tpu.memref_slice %arg2[%0, %c0_i32_0] : memref<64x128xf32, #tpu.memory_space<any>> -> memref<1x128xf32, #tpu.memory_space<any>>
    %c0_i32_1 = arith.constant 0 : i32
    %c0_i32_2 = arith.constant 0 : i32
    %2 = tpu.memref_slice %arg9[%c0_i32_1, %c0_i32_2] : memref<4x256xf32, #tpu.memory_space<vmem>> -> memref<1x128xf32, #tpu.memory_space<vmem>>
    %3 = tpu.memref_slice %arg10[%c0_i32] : memref<8x!tpu.dma_semaphore, #tpu.memory_space<semaphore_mem>> -> memref<1x!tpu.dma_semaphore, #tpu.memory_space<semaphore_mem>>
    %4 = tpu.memref_squeeze %3 : memref<1x!tpu.dma_semaphore, #tpu.memory_space<semaphore_mem>> -> memref<!tpu.dma_semaphore, #tpu.memory_space<semaphore_mem>>
    tpu.enqueue_dma source(%1 : memref<1x128xf32, #tpu.memory_space<any>>) target(%2 : memref<1x128xf32, #tpu.memory_space<vmem>>) target_semaphore(%4 : memref<!tpu.dma_semaphore, #tpu.memory_space<semaphore_mem>>)
    %c1 = arith.constant 1 : index
    %5 = memref.load %arg1[%c1] : memref<8xi32, #tpu.memory_space<smem>>
    %c1_i32 = arith.constant 1 : i32
    %c0_i32_3 = arith.constant 0 : i32
    %6 = tpu.memref_slice %arg2[%5, %c0_i32_3] : memref<64x128xf32, #tpu.memory_space<any>> -> memref<1x128xf32, #tpu.memory_space<any>>
    %c0_i32_4 = arith.constant 0 : i32
    %c128_i32 = arith.constant 128 : i32
    %7 = tpu.memref_slice %arg9[%c0_i32_4, %c128_i32] : memref<4x256xf32, #tpu.memory_space<vmem>> -> memref<1x128xf32, #tpu.memory_space<vmem>>
    %8 = tpu.memref_slice %arg10[%c1_i32] : memref<8x!tpu.dma_semaphore, #tpu.memory_space<semaphore_mem>> -> memref<1x!tpu.dma_semaphore, #tpu.memory_space<semaphore_mem>>
    %9 = tpu.memref_squeeze %8 : memref<1x!tpu.dma_semaphore, #tpu.memory_space<semaphore_mem>> -> memref<!tpu.dma_semaphore, #tpu.memory_space<semaphore_mem>>
    tpu.enqueue_dma source(%6 : memref<1x128xf32, #tpu.memory_space<any>>) target(%7 : memref<1x128xf32, #tpu.memory_space<vmem>>) target_semaphore(%9 : memref<!tpu.dma_semaphore, #tpu.memory_space<semaphore_mem>>)
    %c2 = arith.constant 2 : index
    %10 = memref.load %arg1[%c2] : memref<8xi32, #tpu.memory_space<smem>>
    %c2_i32 = arith.constant 2 : i32
    %c0_i32_5 = arith.constant 0 : i32
    %11 = tpu.memref_slice %arg2[%10, %c0_i32_5] : memref<64x128xf32, #tpu.memory_space<any>> -> memref<1x128xf32, #tpu.memory_space<any>>
    %c1_i32_6 = arith.constant 1 : i32
    %c0_i32_7 = arith.constant 0 : i32
    %12 = tpu.memref_slice %arg9[%c1_i32_6, %c0_i32_7] : memref<4x256xf32, #tpu.memory_space<vmem>> -> memref<1x128xf32, #tpu.memory_space<vmem>>
    %13 = tpu.memref_slice %arg10[%c2_i32] : memref<8x!tpu.dma_semaphore, #tpu.memory_space<semaphore_mem>> -> memref<1x!tpu.dma_semaphore, #tpu.memory_space<semaphore_mem>>
    %14 = tpu.memref_squeeze %13 : memref<1x!tpu.dma_semaphore, #tpu.memory_space<semaphore_mem>> -> memref<!tpu.dma_semaphore, #tpu.memory_space<semaphore_mem>>
    tpu.enqueue_dma source(%11 : memref<1x128xf32, #tpu.memory_space<any>>) target(%12 : memref<1x128xf32, #tpu.memory_space<vmem>>) target_semaphore(%14 : memref<!tpu.dma_semaphore, #tpu.memory_space<semaphore_mem>>)
    %c3 = arith.constant 3 : index
    %15 = memref.load %arg1[%c3] : memref<8xi32, #tpu.memory_space<smem>>
    %c3_i32 = arith.constant 3 : i32
    %c0_i32_8 = arith.constant 0 : i32
    %16 = tpu.memref_slice %arg2[%15, %c0_i32_8] : memref<64x128xf32, #tpu.memory_space<any>> -> memref<1x128xf32, #tpu.memory_space<any>>
    %c1_i32_9 = arith.constant 1 : i32
    %c128_i32_10 = arith.constant 128 : i32
    %17 = tpu.memref_slice %arg9[%c1_i32_9, %c128_i32_10] : memref<4x256xf32, #tpu.memory_space<vmem>> -> memref<1x128xf32, #tpu.memory_space<vmem>>
    %18 = tpu.memref_slice %arg10[%c3_i32] : memref<8x!tpu.dma_semaphore, #tpu.memory_space<semaphore_mem>> -> memref<1x!tpu.dma_semaphore, #tpu.memory_space<semaphore_mem>>
    %19 = tpu.memref_squeeze %18 : memref<1x!tpu.dma_semaphore, #tpu.memory_space<semaphore_mem>> -> memref<!tpu.dma_semaphore, #tpu.memory_space<semaphore_mem>>
    tpu.enqueue_dma source(%16 : memref<1x128xf32, #tpu.memory_space<any>>) target(%17 : memref<1x128xf32, #tpu.memory_space<vmem>>) target_semaphore(%19 : memref<!tpu.dma_semaphore, #tpu.memory_space<semaphore_mem>>)
    %c4 = arith.constant 4 : index
    %20 = memref.load %arg1[%c4] : memref<8xi32, #tpu.memory_space<smem>>
    %c4_i32 = arith.constant 4 : i32
    %c0_i32_11 = arith.constant 0 : i32
    %21 = tpu.memref_slice %arg2[%20, %c0_i32_11] : memref<64x128xf32, #tpu.memory_space<any>> -> memref<1x128xf32, #tpu.memory_space<any>>
    %c2_i32_12 = arith.constant 2 : i32
    %c0_i32_13 = arith.constant 0 : i32
    %22 = tpu.memref_slice %arg9[%c2_i32_12, %c0_i32_13] : memref<4x256xf32, #tpu.memory_space<vmem>> -> memref<1x128xf32, #tpu.memory_space<vmem>>
    %23 = tpu.memref_slice %arg10[%c4_i32] : memref<8x!tpu.dma_semaphore, #tpu.memory_space<semaphore_mem>> -> memref<1x!tpu.dma_semaphore, #tpu.memory_space<semaphore_mem>>
    %24 = tpu.memref_squeeze %23 : memref<1x!tpu.dma_semaphore, #tpu.memory_space<semaphore_mem>> -> memref<!tpu.dma_semaphore, #tpu.memory_space<semaphore_mem>>
    tpu.enqueue_dma source(%21 : memref<1x128xf32, #tpu.memory_space<any>>) target(%22 : memref<1x128xf32, #tpu.memory_space<vmem>>) target_semaphore(%24 : memref<!tpu.dma_semaphore, #tpu.memory_space<semaphore_mem>>)
    %c5 = arith.constant 5 : index
    %25 = memref.load %arg1[%c5] : memref<8xi32, #tpu.memory_space<smem>>
    %c5_i32 = arith.constant 5 : i32
    %c0_i32_14 = arith.constant 0 : i32
    %26 = tpu.memref_slice %arg2[%25, %c0_i32_14] : memref<64x128xf32, #tpu.memory_space<any>> -> memref<1x128xf32, #tpu.memory_space<any>>
    %c2_i32_15 = arith.constant 2 : i32
    %c128_i32_16 = arith.constant 128 : i32
    %27 = tpu.memref_slice %arg9[%c2_i32_15, %c128_i32_16] : memref<4x256xf32, #tpu.memory_space<vmem>> -> memref<1x128xf32, #tpu.memory_space<vmem>>
    %28 = tpu.memref_slice %arg10[%c5_i32] : memref<8x!tpu.dma_semaphore, #tpu.memory_space<semaphore_mem>> -> memref<1x!tpu.dma_semaphore, #tpu.memory_space<semaphore_mem>>
    %29 = tpu.memref_squeeze %28 : memref<1x!tpu.dma_semaphore, #tpu.memory_space<semaphore_mem>> -> memref<!tpu.dma_semaphore, #tpu.memory_space<semaphore_mem>>
    tpu.enqueue_dma source(%26 : memref<1x128xf32, #tpu.memory_space<any>>) target(%27 : memref<1x128xf32, #tpu.memory_space<vmem>>) target_semaphore(%29 : memref<!tpu.dma_semaphore, #tpu.memory_space<semaphore_mem>>)
    %c6 = arith.constant 6 : index
    %30 = memref.load %arg1[%c6] : memref<8xi32, #tpu.memory_space<smem>>
    %c6_i32 = arith.constant 6 : i32
    %c0_i32_17 = arith.constant 0 : i32
    %31 = tpu.memref_slice %arg2[%30, %c0_i32_17] : memref<64x128xf32, #tpu.memory_space<any>> -> memref<1x128xf32, #tpu.memory_space<any>>
    %c3_i32_18 = arith.constant 3 : i32
    %c0_i32_19 = arith.constant 0 : i32
    %32 = tpu.memref_slice %arg9[%c3_i32_18, %c0_i32_19] : memref<4x256xf32, #tpu.memory_space<vmem>> -> memref<1x128xf32, #tpu.memory_space<vmem>>
    %33 = tpu.memref_slice %arg10[%c6_i32] : memref<8x!tpu.dma_semaphore, #tpu.memory_space<semaphore_mem>> -> memref<1x!tpu.dma_semaphore, #tpu.memory_space<semaphore_mem>>
    %34 = tpu.memref_squeeze %33 : memref<1x!tpu.dma_semaphore, #tpu.memory_space<semaphore_mem>> -> memref<!tpu.dma_semaphore, #tpu.memory_space<semaphore_mem>>
    tpu.enqueue_dma source(%31 : memref<1x128xf32, #tpu.memory_space<any>>) target(%32 : memref<1x128xf32, #tpu.memory_space<vmem>>) target_semaphore(%34 : memref<!tpu.dma_semaphore, #tpu.memory_space<semaphore_mem>>)
    %c7 = arith.constant 7 : index
    %35 = memref.load %arg1[%c7] : memref<8xi32, #tpu.memory_space<smem>>
    %c7_i32 = arith.constant 7 : i32
    %c0_i32_20 = arith.constant 0 : i32
    %36 = tpu.memref_slice %arg2[%35, %c0_i32_20] : memref<64x128xf32, #tpu.memory_space<any>> -> memref<1x128xf32, #tpu.memory_space<any>>
    %c3_i32_21 = arith.constant 3 : i32
    %c128_i32_22 = arith.constant 128 : i32
    %37 = tpu.memref_slice %arg9[%c3_i32_21, %c128_i32_22] : memref<4x256xf32, #tpu.memory_space<vmem>> -> memref<1x128xf32, #tpu.memory_space<vmem>>
    %38 = tpu.memref_slice %arg10[%c7_i32] : memref<8x!tpu.dma_semaphore, #tpu.memory_space<semaphore_mem>> -> memref<1x!tpu.dma_semaphore, #tpu.memory_space<semaphore_mem>>
    %39 = tpu.memref_squeeze %38 : memref<1x!tpu.dma_semaphore, #tpu.memory_space<semaphore_mem>> -> memref<!tpu.dma_semaphore, #tpu.memory_space<semaphore_mem>>
    tpu.enqueue_dma source(%36 : memref<1x128xf32, #tpu.memory_space<any>>) target(%37 : memref<1x128xf32, #tpu.memory_space<vmem>>) target_semaphore(%39 : memref<!tpu.dma_semaphore, #tpu.memory_space<semaphore_mem>>)
    %c0_i32_23 = arith.constant 0 : i32
    %c0_i32_24 = arith.constant 0 : i32
    %c0_i32_25 = arith.constant 0 : i32
    %40 = tpu.memref_slice %arg2[%c0_i32_24, %c0_i32_25] : memref<64x128xf32, #tpu.memory_space<any>> -> memref<1x128xf32, #tpu.memory_space<any>>
    %c0_i32_26 = arith.constant 0 : i32
    %c0_i32_27 = arith.constant 0 : i32
    %41 = tpu.memref_slice %arg9[%c0_i32_26, %c0_i32_27] : memref<4x256xf32, #tpu.memory_space<vmem>> -> memref<1x128xf32, #tpu.memory_space<vmem>>
    %42 = tpu.memref_slice %arg10[%c0_i32_23] : memref<8x!tpu.dma_semaphore, #tpu.memory_space<semaphore_mem>> -> memref<1x!tpu.dma_semaphore, #tpu.memory_space<semaphore_mem>>
    %43 = tpu.memref_squeeze %42 : memref<1x!tpu.dma_semaphore, #tpu.memory_space<semaphore_mem>> -> memref<!tpu.dma_semaphore, #tpu.memory_space<semaphore_mem>>
    tpu.wait_dma2 semaphore(%43 : memref<!tpu.dma_semaphore, #tpu.memory_space<semaphore_mem>>) src(%40 : memref<1x128xf32, #tpu.memory_space<any>>) dst(%41 : memref<1x128xf32, #tpu.memory_space<vmem>>)
    %c1_i32_28 = arith.constant 1 : i32
    %c0_i32_29 = arith.constant 0 : i32
    %c0_i32_30 = arith.constant 0 : i32
    %44 = tpu.memref_slice %arg2[%c0_i32_29, %c0_i32_30] : memref<64x128xf32, #tpu.memory_space<any>> -> memref<1x128xf32, #tpu.memory_space<any>>
    %c0_i32_31 = arith.constant 0 : i32
    %c128_i32_32 = arith.constant 128 : i32
    %45 = tpu.memref_slice %arg9[%c0_i32_31, %c128_i32_32] : memref<4x256xf32, #tpu.memory_space<vmem>> -> memref<1x128xf32, #tpu.memory_space<vmem>>
    %46 = tpu.memref_slice %arg10[%c1_i32_28] : memref<8x!tpu.dma_semaphore, #tpu.memory_space<semaphore_mem>> -> memref<1x!tpu.dma_semaphore, #tpu.memory_space<semaphore_mem>>
    %47 = tpu.memref_squeeze %46 : memref<1x!tpu.dma_semaphore, #tpu.memory_space<semaphore_mem>> -> memref<!tpu.dma_semaphore, #tpu.memory_space<semaphore_mem>>
    tpu.wait_dma2 semaphore(%47 : memref<!tpu.dma_semaphore, #tpu.memory_space<semaphore_mem>>) src(%44 : memref<1x128xf32, #tpu.memory_space<any>>) dst(%45 : memref<1x128xf32, #tpu.memory_space<vmem>>)
    %c2_i32_33 = arith.constant 2 : i32
    %c0_i32_34 = arith.constant 0 : i32
    %c0_i32_35 = arith.constant 0 : i32
    %48 = tpu.memref_slice %arg2[%c0_i32_34, %c0_i32_35] : memref<64x128xf32, #tpu.memory_space<any>> -> memref<1x128xf32, #tpu.memory_space<any>>
    %c1_i32_36 = arith.constant 1 : i32
    %c0_i32_37 = arith.constant 0 : i32
    %49 = tpu.memref_slice %arg9[%c1_i32_36, %c0_i32_37] : memref<4x256xf32, #tpu.memory_space<vmem>> -> memref<1x128xf32, #tpu.memory_space<vmem>>
    %50 = tpu.memref_slice %arg10[%c2_i32_33] : memref<8x!tpu.dma_semaphore, #tpu.memory_space<semaphore_mem>> -> memref<1x!tpu.dma_semaphore, #tpu.memory_space<semaphore_mem>>
    %51 = tpu.memref_squeeze %50 : memref<1x!tpu.dma_semaphore, #tpu.memory_space<semaphore_mem>> -> memref<!tpu.dma_semaphore, #tpu.memory_space<semaphore_mem>>
    tpu.wait_dma2 semaphore(%51 : memref<!tpu.dma_semaphore, #tpu.memory_space<semaphore_mem>>) src(%48 : memref<1x128xf32, #tpu.memory_space<any>>) dst(%49 : memref<1x128xf32, #tpu.memory_space<vmem>>)
    %c3_i32_38 = arith.constant 3 : i32
    %c0_i32_39 = arith.constant 0 : i32
    %c0_i32_40 = arith.constant 0 : i32
    %52 = tpu.memref_slice %arg2[%c0_i32_39, %c0_i32_40] : memref<64x128xf32, #tpu.memory_space<any>> -> memref<1x128xf32, #tpu.memory_space<any>>
    %c1_i32_41 = arith.constant 1 : i32
    %c128_i32_42 = arith.constant 128 : i32
    %53 = tpu.memref_slice %arg9[%c1_i32_41, %c128_i32_42] : memref<4x256xf32, #tpu.memory_space<vmem>> -> memref<1x128xf32, #tpu.memory_space<vmem>>
    %54 = tpu.memref_slice %arg10[%c3_i32_38] : memref<8x!tpu.dma_semaphore, #tpu.memory_space<semaphore_mem>> -> memref<1x!tpu.dma_semaphore, #tpu.memory_space<semaphore_mem>>
    %55 = tpu.memref_squeeze %54 : memref<1x!tpu.dma_semaphore, #tpu.memory_space<semaphore_mem>> -> memref<!tpu.dma_semaphore, #tpu.memory_space<semaphore_mem>>
    tpu.wait_dma2 semaphore(%55 : memref<!tpu.dma_semaphore, #tpu.memory_space<semaphore_mem>>) src(%52 : memref<1x128xf32, #tpu.memory_space<any>>) dst(%53 : memref<1x128xf32, #tpu.memory_space<vmem>>)
    %c4_i32_43 = arith.constant 4 : i32
    %c0_i32_44 = arith.constant 0 : i32
    %c0_i32_45 = arith.constant 0 : i32
    %56 = tpu.memref_slice %arg2[%c0_i32_44, %c0_i32_45] : memref<64x128xf32, #tpu.memory_space<any>> -> memref<1x128xf32, #tpu.memory_space<any>>
    %c2_i32_46 = arith.constant 2 : i32
    %c0_i32_47 = arith.constant 0 : i32
    %57 = tpu.memref_slice %arg9[%c2_i32_46, %c0_i32_47] : memref<4x256xf32, #tpu.memory_space<vmem>> -> memref<1x128xf32, #tpu.memory_space<vmem>>
    %58 = tpu.memref_slice %arg10[%c4_i32_43] : memref<8x!tpu.dma_semaphore, #tpu.memory_space<semaphore_mem>> -> memref<1x!tpu.dma_semaphore, #tpu.memory_space<semaphore_mem>>
    %59 = tpu.memref_squeeze %58 : memref<1x!tpu.dma_semaphore, #tpu.memory_space<semaphore_mem>> -> memref<!tpu.dma_semaphore, #tpu.memory_space<semaphore_mem>>
    tpu.wait_dma2 semaphore(%59 : memref<!tpu.dma_semaphore, #tpu.memory_space<semaphore_mem>>) src(%56 : memref<1x128xf32, #tpu.memory_space<any>>) dst(%57 : memref<1x128xf32, #tpu.memory_space<vmem>>)
    %c5_i32_48 = arith.constant 5 : i32
    %c0_i32_49 = arith.constant 0 : i32
    %c0_i32_50 = arith.constant 0 : i32
    %60 = tpu.memref_slice %arg2[%c0_i32_49, %c0_i32_50] : memref<64x128xf32, #tpu.memory_space<any>> -> memref<1x128xf32, #tpu.memory_space<any>>
    %c2_i32_51 = arith.constant 2 : i32
    %c128_i32_52 = arith.constant 128 : i32
    %61 = tpu.memref_slice %arg9[%c2_i32_51, %c128_i32_52] : memref<4x256xf32, #tpu.memory_space<vmem>> -> memref<1x128xf32, #tpu.memory_space<vmem>>
    %62 = tpu.memref_slice %arg10[%c5_i32_48] : memref<8x!tpu.dma_semaphore, #tpu.memory_space<semaphore_mem>> -> memref<1x!tpu.dma_semaphore, #tpu.memory_space<semaphore_mem>>
    %63 = tpu.memref_squeeze %62 : memref<1x!tpu.dma_semaphore, #tpu.memory_space<semaphore_mem>> -> memref<!tpu.dma_semaphore, #tpu.memory_space<semaphore_mem>>
    tpu.wait_dma2 semaphore(%63 : memref<!tpu.dma_semaphore, #tpu.memory_space<semaphore_mem>>) src(%60 : memref<1x128xf32, #tpu.memory_space<any>>) dst(%61 : memref<1x128xf32, #tpu.memory_space<vmem>>)
    %c6_i32_53 = arith.constant 6 : i32
    %c0_i32_54 = arith.constant 0 : i32
    %c0_i32_55 = arith.constant 0 : i32
    %64 = tpu.memref_slice %arg2[%c0_i32_54, %c0_i32_55] : memref<64x128xf32, #tpu.memory_space<any>> -> memref<1x128xf32, #tpu.memory_space<any>>
    %c3_i32_56 = arith.constant 3 : i32
    %c0_i32_57 = arith.constant 0 : i32
    %65 = tpu.memref_slice %arg9[%c3_i32_56, %c0_i32_57] : memref<4x256xf32, #tpu.memory_space<vmem>> -> memref<1x128xf32, #tpu.memory_space<vmem>>
    %66 = tpu.memref_slice %arg10[%c6_i32_53] : memref<8x!tpu.dma_semaphore, #tpu.memory_space<semaphore_mem>> -> memref<1x!tpu.dma_semaphore, #tpu.memory_space<semaphore_mem>>
    %67 = tpu.memref_squeeze %66 : memref<1x!tpu.dma_semaphore, #tpu.memory_space<semaphore_mem>> -> memref<!tpu.dma_semaphore, #tpu.memory_space<semaphore_mem>>
    tpu.wait_dma2 semaphore(%67 : memref<!tpu.dma_semaphore, #tpu.memory_space<semaphore_mem>>) src(%64 : memref<1x128xf32, #tpu.memory_space<any>>) dst(%65 : memref<1x128xf32, #tpu.memory_space<vmem>>)
    %c7_i32_58 = arith.constant 7 : i32
    %c0_i32_59 = arith.constant 0 : i32
    %c0_i32_60 = arith.constant 0 : i32
    %68 = tpu.memref_slice %arg2[%c0_i32_59, %c0_i32_60] : memref<64x128xf32, #tpu.memory_space<any>> -> memref<1x128xf32, #tpu.memory_space<any>>
    %c3_i32_61 = arith.constant 3 : i32
    %c128_i32_62 = arith.constant 128 : i32
    %69 = tpu.memref_slice %arg9[%c3_i32_61, %c128_i32_62] : memref<4x256xf32, #tpu.memory_space<vmem>> -> memref<1x128xf32, #tpu.memory_space<vmem>>
    %70 = tpu.memref_slice %arg10[%c7_i32_58] : memref<8x!tpu.dma_semaphore, #tpu.memory_space<semaphore_mem>> -> memref<1x!tpu.dma_semaphore, #tpu.memory_space<semaphore_mem>>
    %71 = tpu.memref_squeeze %70 : memref<1x!tpu.dma_semaphore, #tpu.memory_space<semaphore_mem>> -> memref<!tpu.dma_semaphore, #tpu.memory_space<semaphore_mem>>
    tpu.wait_dma2 semaphore(%71 : memref<!tpu.dma_semaphore, #tpu.memory_space<semaphore_mem>>) src(%68 : memref<1x128xf32, #tpu.memory_space<any>>) dst(%69 : memref<1x128xf32, #tpu.memory_space<vmem>>)
    %c0_63 = arith.constant 0 : index
    %c0_64 = arith.constant 0 : index
    %72 = vector.load %arg9[%c0_63, %c0_64] : memref<4x256xf32, #tpu.memory_space<vmem>>, vector<4x256xf32>
    %c0_65 = arith.constant 0 : index
    %c0_66 = arith.constant 0 : index
    %73 = vector.load %arg3[%c0_65, %c0_66] : memref<256x128xf32, #tpu.memory_space<vmem>>, vector<256x128xf32>
    %cst = arith.constant dense<0.000000e+00> : vector<4x128xf32>
    %74 = tpu.matmul %72, %73, %cst {dimension_numbers = #tpu.dot_dimension_numbers<[1], [0], [0], [1], [0, 0, 1, 1], [], []>} : vector<4x256xf32>, vector<256x128xf32>, vector<4x128xf32> -> vector<4x128xf32>
    %c0_67 = arith.constant 0 : index
    %c0_68 = arith.constant 0 : index
    %75 = vector.load %arg4[%c0_67, %c0_68] : memref<1x128xf32, #tpu.memory_space<vmem>>, vector<1x128xf32>
    %76 = vector.broadcast %75 : vector<1x128xf32> to vector<4x128xf32>
    %77 = arith.addf %74, %76 : vector<4x128xf32>
    %cst_69 = arith.constant 0.000000e+00 : f32
    %78 = vector.broadcast %cst_69 : f32 to vector<4x128xf32>
    %79 = arith.maximumf %77, %78 : vector<4x128xf32>
    %c0_70 = arith.constant 0 : index
    %c0_71 = arith.constant 0 : index
    %80 = vector.load %arg5[%c0_70, %c0_71] : memref<128x128xf32, #tpu.memory_space<vmem>>, vector<128x128xf32>
    %cst_72 = arith.constant dense<0.000000e+00> : vector<4x128xf32>
    %81 = tpu.matmul %79, %80, %cst_72 {dimension_numbers = #tpu.dot_dimension_numbers<[1], [0], [0], [1], [0, 0, 1, 1], [], []>} : vector<4x128xf32>, vector<128x128xf32>, vector<4x128xf32> -> vector<4x128xf32>
    %c0_73 = arith.constant 0 : index
    %c0_74 = arith.constant 0 : index
    %82 = vector.load %arg6[%c0_73, %c0_74] : memref<1x128xf32, #tpu.memory_space<vmem>>, vector<1x128xf32>
    %83 = vector.broadcast %82 : vector<1x128xf32> to vector<4x128xf32>
    %84 = arith.addf %81, %83 : vector<4x128xf32>
    %cst_75 = arith.constant 0.000000e+00 : f32
    %85 = vector.broadcast %cst_75 : f32 to vector<4x128xf32>
    %86 = arith.subf %85, %84 : vector<4x128xf32>
    %87 = math.exp %86 : vector<4x128xf32>
    %cst_76 = arith.constant 1.000000e+00 : f32
    %88 = vector.broadcast %cst_76 : f32 to vector<4x128xf32>
    %89 = arith.addf %88, %87 : vector<4x128xf32>
    %cst_77 = arith.constant 1.000000e+00 : f32
    %90 = vector.broadcast %cst_77 : f32 to vector<4x128xf32>
    %91 = arith.divf %90, %89 : vector<4x128xf32>
    %c0_78 = arith.constant 0 : index
    %c0_79 = arith.constant 0 : index
    %92 = vector.load %arg7[%c0_78, %c0_79] : memref<4x128xf32, #tpu.memory_space<vmem>>, vector<4x128xf32>
    %cst_80 = arith.constant 0.000000e+00 : f32
    %93 = vector.broadcast %cst_80 : f32 to vector<4x128xf32>
    %94 = arith.maximumf %84, %93 : vector<4x128xf32>
    %95 = arith.mulf %84, %92 : vector<4x128xf32>
    %96 = arith.subf %94, %95 : vector<4x128xf32>
    %97 = math.absf %84 : vector<4x128xf32>
    %cst_81 = arith.constant 0.000000e+00 : f32
    %98 = vector.broadcast %cst_81 : f32 to vector<4x128xf32>
    %99 = arith.subf %98, %97 : vector<4x128xf32>
    %100 = math.exp %99 : vector<4x128xf32>
    %101 = math.log1p %100 : vector<4x128xf32>
    %102 = arith.addf %96, %101 : vector<4x128xf32>
    %103 = tpu.iota {dimensions = array<i32: 1>} : vector<4x128xi32>
    %c8_i32 = arith.constant 8 : i32
    %104 = vector.broadcast %c8_i32 : i32 to vector<4x128xi32>
    %105 = arith.cmpi slt, %103, %104 : vector<4x128xi32>
    %106 = arith.extui %105 : vector<4x128xi1> to vector<4x128xi32>
    %107 = arith.sitofp %106 : vector<4x128xi32> to vector<4x128xf32>
    %c8_i32_82 = arith.constant 8 : i32
    %108 = vector.broadcast %c8_i32_82 : i32 to vector<4x128xi32>
    %109 = arith.cmpi sge, %103, %108 : vector<4x128xi32>
    %c16_i32 = arith.constant 16 : i32
    %110 = vector.broadcast %c16_i32 : i32 to vector<4x128xi32>
    %111 = arith.cmpi slt, %103, %110 : vector<4x128xi32>
    %112 = arith.andi %109, %111 : vector<4x128xi1>
    %113 = arith.extui %112 : vector<4x128xi1> to vector<4x128xi32>
    %114 = arith.sitofp %113 : vector<4x128xi32> to vector<4x128xf32>
    %115 = arith.mulf %102, %107 : vector<4x128xf32>
    %116 = vector.shape_cast %115 : vector<4x128xf32> to vector<1x4x128xf32>
    %cst_83 = arith.constant dense<0.000000e+00> : vector<1xf32>
    %117 = vector.multi_reduction <add>, %116, %cst_83 [1, 2] : vector<1x4x128xf32> to vector<1xf32>
    %118 = vector.shape_cast %117 : vector<1xf32> to vector<1x1x1xf32>
    %119 = vector.extract %118[0, 0, 0] : f32 from vector<1x1x1xf32>
    %cst_84 = arith.constant 3.125000e-02 : f32
    %120 = arith.mulf %119, %cst_84 : f32
    %121 = vector.extract_strided_slice %92 {offsets = [0, 2], sizes = [4, 1], strides = [1, 1]} : vector<4x128xf32> to vector<4x1xf32>
    %cst_85 = arith.constant 1.000000e+00 : f32
    %122 = vector.broadcast %cst_85 : f32 to vector<4x1xf32>
    %123 = arith.cmpf oeq, %121, %122 : vector<4x1xf32>
    %124 = arith.extui %123 : vector<4x1xi1> to vector<4x1xi32>
    %125 = arith.sitofp %124 : vector<4x1xi32> to vector<4x1xf32>
    %126 = vector.shape_cast %125 : vector<4x1xf32> to vector<1x4x1xf32>
    %cst_86 = arith.constant dense<0.000000e+00> : vector<1xf32>
    %127 = vector.multi_reduction <add>, %126, %cst_86 [1, 2] : vector<1x4x1xf32> to vector<1xf32>
    %128 = vector.shape_cast %127 : vector<1xf32> to vector<1x1x1xf32>
    %129 = vector.extract %128[0, 0, 0] : f32 from vector<1x1x1xf32>
    %130 = arith.mulf %102, %114 : vector<4x128xf32>
    %131 = vector.broadcast %125 : vector<4x1xf32> to vector<4x128xf32>
    %132 = arith.mulf %130, %131 : vector<4x128xf32>
    %133 = vector.shape_cast %132 : vector<4x128xf32> to vector<1x4x128xf32>
    %cst_87 = arith.constant dense<0.000000e+00> : vector<1xf32>
    %134 = vector.multi_reduction <add>, %133, %cst_87 [1, 2] : vector<1x4x128xf32> to vector<1xf32>
    %135 = vector.shape_cast %134 : vector<1xf32> to vector<1x1x1xf32>
    %136 = vector.extract %135[0, 0, 0] : f32 from vector<1x1x1xf32>
    %cst_88 = arith.constant 0.000000e+00 : f32
    %137 = arith.cmpf ogt, %129, %cst_88 : f32
    %cst_89 = arith.constant 8.000000e+00 : f32
    %138 = arith.mulf %129, %cst_89 : f32
    %139 = arith.divf %136, %138 : f32
    %cst_90 = arith.constant 0.000000e+00 : f32
    %140 = arith.select %137, %139, %cst_90 : f32
    %141 = tpu.iota {dimensions = array<i32: 0>} : vector<4x128xi32>
    %c0_i32_91 = arith.constant 0 : i32
    %142 = vector.broadcast %c0_i32_91 : i32 to vector<4x128xi32>
    %143 = arith.cmpi eq, %141, %142 : vector<4x128xi32>
    %c16_i32_92 = arith.constant 16 : i32
    %144 = vector.broadcast %c16_i32_92 : i32 to vector<4x128xi32>
    %145 = arith.cmpi eq, %103, %144 : vector<4x128xi32>
    %146 = arith.andi %143, %145 : vector<4x128xi1>
    %147 = vector.broadcast %120 : f32 to vector<4x128xf32>
    %148 = arith.select %146, %147, %91 : vector<4x128xi1>, vector<4x128xf32>
    %c17_i32 = arith.constant 17 : i32
    %149 = vector.broadcast %c17_i32 : i32 to vector<4x128xi32>
    %150 = arith.cmpi eq, %103, %149 : vector<4x128xi32>
    %151 = arith.andi %143, %150 : vector<4x128xi1>
    %152 = vector.broadcast %140 : f32 to vector<4x128xf32>
    %153 = arith.select %151, %152, %148 : vector<4x128xi1>, vector<4x128xf32>
    %c0_93 = arith.constant 0 : index
    %c0_94 = arith.constant 0 : index
    %154 = vector.load %arg8[%c0_93, %c0_94] : memref<4x128xf32, #tpu.memory_space<vmem>>, vector<4x128xf32>
    tpu.vector_store %arg8[%c0_93, %c0_94], %153 {strides = array<i32>} : memref<4x128xf32, #tpu.memory_space<vmem>>, vector<4x128xf32>,
    return
  }
  func.func @transform_1(%arg0: i32, %arg1: memref<8xi32, #tpu.memory_space<smem>>) -> (i32, i32) {
    %c0_i32 = arith.constant 0 : i32
    %c0_i32_0 = arith.constant 0 : i32
    %c0_i32_1 = arith.constant 0 : i32
    return %c0_i32, %c0_i32_0 : i32, i32
  }
  func.func @transform_2(%arg0: i32, %arg1: memref<8xi32, #tpu.memory_space<smem>>) -> (i32, i32) {
    %c0_i32 = arith.constant 0 : i32
    %c0_i32_0 = arith.constant 0 : i32
    %c0_i32_1 = arith.constant 0 : i32
    return %c0_i32, %c0_i32_0 : i32, i32
  }
  func.func @transform_3(%arg0: i32, %arg1: memref<8xi32, #tpu.memory_space<smem>>) -> (i32, i32) {
    %c0_i32 = arith.constant 0 : i32
    %c0_i32_0 = arith.constant 0 : i32
    %c0_i32_1 = arith.constant 0 : i32
    return %c0_i32, %c0_i32_0 : i32, i32
  }
  func.func @transform_4(%arg0: i32, %arg1: memref<8xi32, #tpu.memory_space<smem>>) -> (i32, i32) {
    %c0_i32 = arith.constant 0 : i32
    %c0_i32_0 = arith.constant 0 : i32
    %c0_i32_1 = arith.constant 0 : i32
    return %c0_i32, %c0_i32_0 : i32, i32
  }
  func.func @transform_5(%arg0: i32, %arg1: memref<8xi32, #tpu.memory_space<smem>>) -> (i32, i32) {
    %c0_i32 = arith.constant 0 : i32
    %c0_i32_0 = arith.constant 0 : i32
    %c0_i32_1 = arith.constant 0 : i32
    return %c0_i32, %c0_i32_0 : i32, i32
  }
  func.func @transform_6(%arg0: i32, %arg1: memref<8xi32, #tpu.memory_space<smem>>) -> (i32, i32) {
    %c0_i32 = arith.constant 0 : i32
    %c0_i32_0 = arith.constant 0 : i32
    %c0_i32_1 = arith.constant 0 : i32
    return %c0_i32, %c0_i32_0 : i32, i32
  }
}

</mosaic_0001>

<llo_original>
// kernel: blanknet_forward.1
$region0: #{blanknet_forward.1}
  #allocation0 [shape = 'u32[]', space=smem, size = 0x4, offset = 0x4, fixed_abs, tag = 'smem constant byte address 0x4 - core index']
  #allocation1 [shape = 'u32[144,128]{1,0:T(1,128)}', space=vmem, size = 0x12000, scoped, tag = 'internal scratch']
  #allocation2 [shape = 'f32[4,256]{1,0:T(4,128)}', space=vmem, size = 0x1000, scoped, tag = 'scratch operand']
  #allocation3 [shape = 's32[8]{0}', space=sflag, size = 0x20, scoped, tag = 'scratch operand']
  #allocation4 [shape = 's32[1]{0}', space=sflag, size = 0x4, scoped, tag = 'scoped memory for blanknet_forward.1']
  #allocation5 [shape = 'u8[512]{0}', space=smem, size = 0x200, scoped, tag = 'prefetched SMEM operand 0']
  #allocation6 [shape = 's32[]', space=sflag, size = 0x4, offset = 0, fixed_abs, tag = 'sflag constant byte address 0x0 - dummy sync flag']
  #allocation7 [shape = 's32[]', space=sflag, size = 0x4, offset = 0, fixed_abs, tag = 'sflag constant byte address 0x0 - dummy sync flag']
  #allocation8 [shape = 's32[]', space=sflag, size = 0x4, offset = 0, fixed_abs, tag = 'sflag constant byte address 0x0 - dummy sync flag']
  #allocation9 [shape = 's32[]', space=sflag, size = 0x4, offset = 0, fixed_abs, tag = 'sflag constant byte address 0x0 - dummy sync flag']
  #allocation10 [shape = 's32[]', space=sflag, size = 0x4, offset = 0, fixed_abs, tag = 'sflag constant byte address 0x0 - dummy sync flag']
  #allocation11 [shape = 's32[]', space=sflag, size = 0x4, offset = 0, fixed_abs, tag = 'sflag constant byte address 0x0 - dummy sync flag']
  #allocation12 [shape = 's32[]', space=sflag, size = 0x4, offset = 0, fixed_abs, tag = 'sflag constant byte address 0x0 - dummy sync flag']
  #allocation13 [shape = 's32[]', space=sflag, size = 0x4, offset = 0, fixed_abs, tag = 'sflag constant byte address 0x0 - dummy sync flag']
  %s0 = inlined_call_operand.vmem [shape: s32[8], index: 0, kind: input, shape index: {}]
  %s1 = inlined_call_operand.vmem [shape: f32[64,128], index: 1, kind: input, shape index: {}]
  %s2 = inlined_call_operand.vmem [shape: f32[256,128], index: 2, kind: input, shape index: {}]
  %s3 = inlined_call_operand.vmem [shape: f32[1,128], index: 3, kind: input, shape index: {}]
  %s4 = inlined_call_operand.vmem [shape: f32[128,128], index: 4, kind: input, shape index: {}]
  %s5 = inlined_call_operand.vmem [shape: f32[1,128], index: 5, kind: input, shape index: {}]
  %s6 = inlined_call_operand.vmem [shape: f32[4,128], index: 6, kind: input, shape index: {}]
  %s7 = inlined_call_operand.vmem [shape: f32[4,128], index: 7, kind: output, shape index: {}]
  %s8 = sld [smem:[#allocation0]]
  $region270: #{blanknet_forward.1} parent=0
    _
  %s10 = ssub.s32 1, %s8
  %s11 = scalar_select 0, %s10, %s8
  %s12 = sshll.u32 %s0, 4
  %s13 = int_to_ptr.vmem [resolvable:$true] %s12
  %15 = dma.vmem_to_smem %s13, 16, [#allocation5], [#allocation4]
  %16 = dma.done [#allocation4], 16
  %17 = sfence
  // Predicated region
  $region2: #{blanknet_forward.1} parent=0 // pred_check
    _
  $region3: #{blanknet_forward.1} parent=0 // pred_check_branch
    %19 = sbr.rel (0) target = $region5
  $region4: #{blanknet_forward.1} parent=0 // pred_region
    _
  $region5: #{blanknet_forward.1} parent=0 // pred_fallthru
    _
  // Predicated region
  $region6: #{blanknet_forward.1} parent=0 // pred_check
    _
  $region7: #{blanknet_forward.1} parent=0 // pred_check_branch
    %21 = sbr.rel (0) target = $region9
  $region8: #{blanknet_forward.1} parent=0 // pred_region
    _
  $region9: #{blanknet_forward.1} parent=0 // pred_fallthru
    _
  // Predicated region
  $region10: #{blanknet_forward.1} parent=0 // pred_check
    _
  $region11: #{blanknet_forward.1} parent=0 // pred_check_branch
    %23 = sbr.rel (0) target = $region13
  $region12: #{blanknet_forward.1} parent=0 // pred_region
    _
  $region13: #{blanknet_forward.1} parent=0 // pred_fallthru
    _
  // Predicated region
  $region14: #{blanknet_forward.1} parent=0 // pred_check
    _
  $region15: #{blanknet_forward.1} parent=0 // pred_check_branch
    %25 = sbr.rel (0) target = $region17
  $region16: #{blanknet_forward.1} parent=0 // pred_region
    _
  $region17: #{blanknet_forward.1} parent=0 // pred_fallthru
    _
  // Predicated region
  $region18: #{blanknet_forward.1} parent=0 // pred_check
    _
  $region19: #{blanknet_forward.1} parent=0 // pred_check_branch
    %27 = sbr.rel (0) target = $region21
  $region20: #{blanknet_forward.1} parent=0 // pred_region
    _
  $region21: #{blanknet_forward.1} parent=0 // pred_fallthru
    _
  %s28 = sld [smem:[#allocation5]]
  %s29 = scalar_lea.vmem %s1, %s28
  %p31 = scmp.lt.u32.totalorder 1, 8
  %p32 = pneg %p31
  // Predicated region
  $region22: #{blanknet_forward.1} parent=0 // pred_check
    _
  $region23: #{blanknet_forward.1} parent=0 // pred_check_branch
    %34 = sbr.rel (%p31) target = $region25
  $region24: #{blanknet_forward.1} parent=0 // pred_region
    %s49 = sand.u32 1, 7
    %p50 = scmp.eq.s32.totalorder %s49, 0
    %p51 = pneg %p50
    // Predicated region
    $region37: #{blanknet_forward.1} parent=24 // pred_check
      _
    $region38: #{blanknet_forward.1} parent=24 // pred_check_branch
      %53 = sbr.rel (%p50) target = $region40
    $region39: #{blanknet_forward.1} parent=24 // pred_region
      %s54 = sand.u32 1, 7
      %s55 = ssub.s32 1, %s54
      %s56 = scalar_lea.vmem %s29, %s55
      %s57 = ssub.s32 1, %s54
      %s58 = scalar_lea.vmem [#allocation2], %s57
      %s59 = sshllo.u32 0, %s54
      loop: start=0, step=1, limit=1
      $region41: #{blanknet_forward.1} parent=39 // loop_pre_header
        _
      $region42: #{blanknet_forward.1} parent=39 // loop_header
        %s61 = sphi 0, %s65
        %p62 = scmp.ge.s32.totalorder %s61, 1
        %s66 = sphi %s56, %s56
        %s67 = sphi %s58, %s58
      $region43: #{blanknet_forward.1} parent=39 // loop_header_branch
        %64 = sbr.rel (%p62) target = $region47
      $region44: #{blanknet_forward.1} parent=39 // loop_body
        %v68 = vld [vmem:[%s66] sm:%s59]
        %69 = vst [vmem:[%s67] sm:%s59] %v68
      $region45: #{blanknet_forward.1} parent=39 // loop_footer
        %s65 = sadd.s32 1, %s61
      $region46: #{blanknet_forward.1} parent=39 // loop_footer_branch
        %60 = sbr.rel target = $region42
      $region47: #{blanknet_forward.1} parent=39 // loop_exit
        _
    $region40: #{blanknet_forward.1} parent=24 // pred_fallthru
      _
  $region25: #{blanknet_forward.1} parent=0 // pred_fallthru
    _
  // Predicated region
  $region26: #{blanknet_forward.1} parent=0 // pred_check
    %p35 = pneg %p31
  $region27: #{blanknet_forward.1} parent=0 // pred_check_branch
    %37 = sbr.rel (%p35) target = $region29
  $region28: #{blanknet_forward.1} parent=0 // pred_region
    %s38 = sshllo.u32 0, 1
    loop: start=0, step=1, limit=1
    $region30: #{blanknet_forward.1} parent=28 // loop_pre_header
      _
    $region31: #{blanknet_forward.1} parent=28 // loop_header
      %s40 = sphi 0, %s44
      %p41 = scmp.ge.s32.totalorder %s40, 1
      %s45 = sphi %s29, %s29
      %s46 = sphi [#allocation2], [#allocation2]
    $region32: #{blanknet_forward.1} parent=28 // loop_header_branch
      %43 = sbr.rel (%p41) target = $region36
    $region33: #{blanknet_forward.1} parent=28 // loop_body
      %v47 = vld [vmem:[%s45] sm:%s38]
      %48 = vst [vmem:[%s46] sm:%s38] %v47
    $region34: #{blanknet_forward.1} parent=28 // loop_footer
      %s44 = sadd.s32 1, %s40
    $region35: #{blanknet_forward.1} parent=28 // loop_footer_branch
      %39 = sbr.rel target = $region31
    $region36: #{blanknet_forward.1} parent=28 // loop_exit
      _
  $region29: #{blanknet_forward.1} parent=0 // pred_fallthru
    _
  // Predicated region
  $region48: #{blanknet_forward.1} parent=0 // pred_check
    _
  $region49: #{blanknet_forward.1} parent=0 // pred_check_branch
    %72 = sbr.rel (0) target = $region51
  $region50: #{blanknet_forward.1} parent=0 // pred_region
    %73 = vsyncadd [#allocation3], 16
  $region51: #{blanknet_forward.1} parent=0 // pred_fallthru
    _
  %s74 = sld [smem:[#allocation5 + $0x1]]
  %s75 = scalar_lea.vmem %s1, %s74
  %s76 = scalar_lea.vmem [#allocation2], 4
  %s77 = scalar_lea.sflag [#allocation3], 1
  %p79 = scmp.lt.u32.totalorder 1, 8
  %p80 = pneg %p79
  // Predicated region
  $region52: #{blanknet_forward.1} parent=0 // pred_check
    _
  $region53: #{blanknet_forward.1} parent=0 // pred_check_branch
    %82 = sbr.rel (%p79) target = $region55
  $region54: #{blanknet_forward.1} parent=0 // pred_region
    %s97 = sand.u32 1, 7
    %p98 = scmp.eq.s32.totalorder %s97, 0
    %p99 = pneg %p98
    // Predicated region
    $region67: #{blanknet_forward.1} parent=54 // pred_check
      _
    $region68: #{blanknet_forward.1} parent=54 // pred_check_branch
      %101 = sbr.rel (%p98) target = $region70
    $region69: #{blanknet_forward.1} parent=54 // pred_region
      %s102 = sand.u32 1, 7
      %s103 = ssub.s32 1, %s102
      %s104 = scalar_lea.vmem %s75, %s103
      %s105 = ssub.s32 1, %s102
      %s106 = scalar_lea.vmem %s76, %s105 [#allocation2]
      %s107 = sshllo.u32 0, %s102
      loop: start=0, step=1, limit=1
      $region71: #{blanknet_forward.1} parent=69 // loop_pre_header
        _
      $region72: #{blanknet_forward.1} parent=69 // loop_header
        %s109 = sphi 0, %s113
        %p110 = scmp.ge.s32.totalorder %s109, 1
        %s114 = sphi %s104, %s104
        %s115 = sphi %s106, %s106
      $region73: #{blanknet_forward.1} parent=69 // loop_header_branch
        %112 = sbr.rel (%p110) target = $region77
      $region74: #{blanknet_forward.1} parent=69 // loop_body
        %v116 = vld [vmem:[%s114] sm:%s107]
        %117 = vst [vmem:[%s115] sm:%s107] %v116
      $region75: #{blanknet_forward.1} parent=69 // loop_footer
        %s113 = sadd.s32 1, %s109
      $region76: #{blanknet_forward.1} parent=69 // loop_footer_branch
        %108 = sbr.rel target = $region72
      $region77: #{blanknet_forward.1} parent=69 // loop_exit
        _
    $region70: #{blanknet_forward.1} parent=54 // pred_fallthru
      _
  $region55: #{blanknet_forward.1} parent=0 // pred_fallthru
    _
  // Predicated region
  $region56: #{blanknet_forward.1} parent=0 // pred_check
    %p83 = pneg %p79
  $region57: #{blanknet_forward.1} parent=0 // pred_check_branch
    %85 = sbr.rel (%p83) target = $region59
  $region58: #{blanknet_forward.1} parent=0 // pred_region
    %s86 = sshllo.u32 0, 1
    loop: start=0, step=1, limit=1
    $region60: #{blanknet_forward.1} parent=58 // loop_pre_header
      _
    $region61: #{blanknet_forward.1} parent=58 // loop_header
      %s88 = sphi 0, %s92
      %p89 = scmp.ge.s32.totalorder %s88, 1
      %s93 = sphi %s75, %s75
      %s94 = sphi %s76, %s76
    $region62: #{blanknet_forward.1} parent=58 // loop_header_branch
      %91 = sbr.rel (%p89) target = $region66
    $region63: #{blanknet_forward.1} parent=58 // loop_body
      %v95 = vld [vmem:[%s93] sm:%s86]
      %96 = vst [vmem:[%s94] sm:%s86] %v95
    $region64: #{blanknet_forward.1} parent=58 // loop_footer
      %s92 = sadd.s32 1, %s88
    $region65: #{blanknet_forward.1} parent=58 // loop_footer_branch
      %87 = sbr.rel target = $region61
    $region66: #{blanknet_forward.1} parent=58 // loop_exit
      _
  $region59: #{blanknet_forward.1} parent=0 // pred_fallthru
    _
  // Predicated region
  $region78: #{blanknet_forward.1} parent=0 // pred_check
    _
  $region79: #{blanknet_forward.1} parent=0 // pred_check_branch
    %120 = sbr.rel (0) target = $region81
  $region80: #{blanknet_forward.1} parent=0 // pred_region
    %121 = vsyncadd %s77, 16
  $region81: #{blanknet_forward.1} parent=0 // pred_fallthru
    _
  %s122 = sld [smem:[#allocation5 + $0x2]]
  %s123 = scalar_lea.vmem %s1, %s122
  %s124 = scalar_lea.vmem [#allocation2], 1
  %s125 = scalar_lea.sflag [#allocation3], 2
  %p127 = scmp.lt.u32.totalorder 1, 8
  %p128 = pneg %p127
  // Predicated region
  $region82: #{blanknet_forward.1} parent=0 // pred_check
    _
  $region83: #{blanknet_forward.1} parent=0 // pred_check_branch
    %130 = sbr.rel (%p127) target = $region85
  $region84: #{blanknet_forward.1} parent=0 // pred_region
    %s145 = sand.u32 1, 7
    %p146 = scmp.eq.s32.totalorder %s145, 0
    %p147 = pneg %p146
    // Predicated region
    $region97: #{blanknet_forward.1} parent=84 // pred_check
      _
    $region98: #{blanknet_forward.1} parent=84 // pred_check_branch
      %149 = sbr.rel (%p146) target = $region100
    $region99: #{blanknet_forward.1} parent=84 // pred_region
      %s150 = sand.u32 1, 7
      %s151 = ssub.s32 1, %s150
      %s152 = scalar_lea.vmem %s123, %s151
      %s153 = ssub.s32 1, %s150
      %s154 = scalar_lea.vmem %s124, %s153 [#allocation2]
      %s155 = sshllo.u32 0, %s150
      loop: start=0, step=1, limit=1
      $region101: #{blanknet_forward.1} parent=99 // loop_pre_header
        _
      $region102: #{blanknet_forward.1} parent=99 // loop_header
        %s157 = sphi 0, %s161
        %p158 = scmp.ge.s32.totalorder %s157, 1
        %s162 = sphi %s152, %s152
        %s163 = sphi %s154, %s154
      $region103: #{blanknet_forward.1} parent=99 // loop_header_branch
        %160 = sbr.rel (%p158) target = $region107
      $region104: #{blanknet_forward.1} parent=99 // loop_body
        %v164 = vld [vmem:[%s162] sm:%s155]
        %165 = vst [vmem:[%s163] sm:%s155] %v164
      $region105: #{blanknet_forward.1} parent=99 // loop_footer
        %s161 = sadd.s32 1, %s157
      $region106: #{blanknet_forward.1} parent=99 // loop_footer_branch
        %156 = sbr.rel target = $region102
      $region107: #{blanknet_forward.1} parent=99 // loop_exit
        _
    $region100: #{blanknet_forward.1} parent=84 // pred_fallthru
      _
  $region85: #{blanknet_forward.1} parent=0 // pred_fallthru
    _
  // Predicated region
  $region86: #{blanknet_forward.1} parent=0 // pred_check
    %p131 = pneg %p127
  $region87: #{blanknet_forward.1} parent=0 // pred_check_branch
    %133 = sbr.rel (%p131) target = $region89
  $region88: #{blanknet_forward.1} parent=0 // pred_region
    %s134 = sshllo.u32 0, 1
    loop: start=0, step=1, limit=1
    $region90: #{blanknet_forward.1} parent=88 // loop_pre_header
      _
    $region91: #{blanknet_forward.1} parent=88 // loop_header
      %s136 = sphi 0, %s140
      %p137 = scmp.ge.s32.totalorder %s136, 1
      %s141 = sphi %s123, %s123
      %s142 = sphi %s124, %s124
    $region92: #{blanknet_forward.1} parent=88 // loop_header_branch
      %139 = sbr.rel (%p137) target = $region96
    $region93: #{blanknet_forward.1} parent=88 // loop_body
      %v143 = vld [vmem:[%s141] sm:%s134]
      %144 = vst [vmem:[%s142] sm:%s134] %v143
    $region94: #{blanknet_forward.1} parent=88 // loop_footer
      %s140 = sadd.s32 1, %s136
    $region95: #{blanknet_forward.1} parent=88 // loop_footer_branch
      %135 = sbr.rel target = $region91
    $region96: #{blanknet_forward.1} parent=88 // loop_exit
      _
  $region89: #{blanknet_forward.1} parent=0 // pred_fallthru
    _
  // Predicated region
  $region108: #{blanknet_forward.1} parent=0 // pred_check
    _
  $region109: #{blanknet_forward.1} parent=0 // pred_check_branch
    %168 = sbr.rel (0) target = $region111
  $region110: #{blanknet_forward.1} parent=0 // pred_region
    %169 = vsyncadd %s125, 16
  $region111: #{blanknet_forward.1} parent=0 // pred_fallthru
    _
  %s170 = sld [smem:[#allocation5 + $0x3]]
  %s171 = scalar_lea.vmem %s1, %s170
  %s172 = scalar_lea.vmem [#allocation2], 5
  %s173 = scalar_lea.sflag [#allocation3], 3
  %p175 = scmp.lt.u32.totalorder 1, 8
  %p176 = pneg %p175
  // Predicated region
  $region112: #{blanknet_forward.1} parent=0 // pred_check
    _
  $region113: #{blanknet_forward.1} parent=0 // pred_check_branch
    %178 = sbr.rel (%p175) target = $region115
  $region114: #{blanknet_forward.1} parent=0 // pred_region
    %s193 = sand.u32 1, 7
    %p194 = scmp.eq.s32.totalorder %s193, 0
    %p195 = pneg %p194
    // Predicated region
    $region127: #{blanknet_forward.1} parent=114 // pred_check
      _
    $region128: #{blanknet_forward.1} parent=114 // pred_check_branch
      %197 = sbr.rel (%p194) target = $region130
    $region129: #{blanknet_forward.1} parent=114 // pred_region
      %s198 = sand.u32 1, 7
      %s199 = ssub.s32 1, %s198
      %s200 = scalar_lea.vmem %s171, %s199
      %s201 = ssub.s32 1, %s198
      %s202 = scalar_lea.vmem %s172, %s201 [#allocation2]
      %s203 = sshllo.u32 0, %s198
      loop: start=0, step=1, limit=1
      $region131: #{blanknet_forward.1} parent=129 // loop_pre_header
        _
      $region132: #{blanknet_forward.1} parent=129 // loop_header
        %s205 = sphi 0, %s209
        %p206 = scmp.ge.s32.totalorder %s205, 1
        %s210 = sphi %s200, %s200
        %s211 = sphi %s202, %s202
      $region133: #{blanknet_forward.1} parent=129 // loop_header_branch
        %208 = sbr.rel (%p206) target = $region137
      $region134: #{blanknet_forward.1} parent=129 // loop_body
        %v212 = vld [vmem:[%s210] sm:%s203]
        %213 = vst [vmem:[%s211] sm:%s203] %v212
      $region135: #{blanknet_forward.1} parent=129 // loop_footer
        %s209 = sadd.s32 1, %s205
      $region136: #{blanknet_forward.1} parent=129 // loop_footer_branch
        %204 = sbr.rel target = $region132
      $region137: #{blanknet_forward.1} parent=129 // loop_exit
        _
    $region130: #{blanknet_forward.1} parent=114 // pred_fallthru
      _
  $region115: #{blanknet_forward.1} parent=0 // pred_fallthru
    _
  // Predicated region
  $region116: #{blanknet_forward.1} parent=0 // pred_check
    %p179 = pneg %p175
  $region117: #{blanknet_forward.1} parent=0 // pred_check_branch
    %181 = sbr.rel (%p179) target = $region119
  $region118: #{blanknet_forward.1} parent=0 // pred_region
    %s182 = sshllo.u32 0, 1
    loop: start=0, step=1, limit=1
    $region120: #{blanknet_forward.1} parent=118 // loop_pre_header
      _
    $region121: #{blanknet_forward.1} parent=118 // loop_header
      %s184 = sphi 0, %s188
      %p185 = scmp.ge.s32.totalorder %s184, 1
      %s189 = sphi %s171, %s171
      %s190 = sphi %s172, %s172
    $region122: #{blanknet_forward.1} parent=118 // loop_header_branch
      %187 = sbr.rel (%p185) target = $region126
    $region123: #{blanknet_forward.1} parent=118 // loop_body
      %v191 = vld [vmem:[%s189] sm:%s182]
      %192 = vst [vmem:[%s190] sm:%s182] %v191
    $region124: #{blanknet_forward.1} parent=118 // loop_footer
      %s188 = sadd.s32 1, %s184
    $region125: #{blanknet_forward.1} parent=118 // loop_footer_branch
      %183 = sbr.rel target = $region121
    $region126: #{blanknet_forward.1} parent=118 // loop_exit
      _
  $region119: #{blanknet_forward.1} parent=0 // pred_fallthru
    _
  // Predicated region
  $region138: #{blanknet_forward.1} parent=0 // pred_check
    _
  $region139: #{blanknet_forward.1} parent=0 // pred_check_branch
    %216 = sbr.rel (0) target = $region141
  $region140: #{blanknet_forward.1} parent=0 // pred_region
    %217 = vsyncadd %s173, 16
  $region141: #{blanknet_forward.1} parent=0 // pred_fallthru
    _
  %s218 = sld [smem:[#allocation5 + $0x4]]
  %s219 = scalar_lea.vmem %s1, %s218
  %s220 = scalar_lea.vmem [#allocation2], 2
  %s221 = scalar_lea.sflag [#allocation3], 4
  %p223 = scmp.lt.u32.totalorder 1, 8
  %p224 = pneg %p223
  // Predicated region
  $region142: #{blanknet_forward.1} parent=0 // pred_check
    _
  $region143: #{blanknet_forward.1} parent=0 // pred_check_branch
    %226 = sbr.rel (%p223) target = $region145
  $region144: #{blanknet_forward.1} parent=0 // pred_region
    %s241 = sand.u32 1, 7
    %p242 = scmp.eq.s32.totalorder %s241, 0
    %p243 = pneg %p242
    // Predicated region
    $region157: #{blanknet_forward.1} parent=144 // pred_check
      _
    $region158: #{blanknet_forward.1} parent=144 // pred_check_branch
      %245 = sbr.rel (%p242) target = $region160
    $region159: #{blanknet_forward.1} parent=144 // pred_region
      %s246 = sand.u32 1, 7
      %s247 = ssub.s32 1, %s246
      %s248 = scalar_lea.vmem %s219, %s247
      %s249 = ssub.s32 1, %s246
      %s250 = scalar_lea.vmem %s220, %s249 [#allocation2]
      %s251 = sshllo.u32 0, %s246
      loop: start=0, step=1, limit=1
      $region161: #{blanknet_forward.1} parent=159 // loop_pre_header
        _
      $region162: #{blanknet_forward.1} parent=159 // loop_header
        %s253 = sphi 0, %s257
        %p254 = scmp.ge.s32.totalorder %s253, 1
        %s258 = sphi %s248, %s248
        %s259 = sphi %s250, %s250
      $region163: #{blanknet_forward.1} parent=159 // loop_header_branch
        %256 = sbr.rel (%p254) target = $region167
      $region164: #{blanknet_forward.1} parent=159 // loop_body
        %v260 = vld [vmem:[%s258] sm:%s251]
        %261 = vst [vmem:[%s259] sm:%s251] %v260
      $region165: #{blanknet_forward.1} parent=159 // loop_footer
        %s257 = sadd.s32 1, %s253
      $region166: #{blanknet_forward.1} parent=159 // loop_footer_branch
        %252 = sbr.rel target = $region162
      $region167: #{blanknet_forward.1} parent=159 // loop_exit
        _
    $region160: #{blanknet_forward.1} parent=144 // pred_fallthru
      _
  $region145: #{blanknet_forward.1} parent=0 // pred_fallthru
    _
  // Predicated region
  $region146: #{blanknet_forward.1} parent=0 // pred_check
    %p227 = pneg %p223
  $region147: #{blanknet_forward.1} parent=0 // pred_check_branch
    %229 = sbr.rel (%p227) target = $region149
  $region148: #{blanknet_forward.1} parent=0 // pred_region
    %s230 = sshllo.u32 0, 1
    loop: start=0, step=1, limit=1
    $region150: #{blanknet_forward.1} parent=148 // loop_pre_header
      _
    $region151: #{blanknet_forward.1} parent=148 // loop_header
      %s232 = sphi 0, %s236
      %p233 = scmp.ge.s32.totalorder %s232, 1
      %s237 = sphi %s219, %s219
      %s238 = sphi %s220, %s220
    $region152: #{blanknet_forward.1} parent=148 // loop_header_branch
      %235 = sbr.rel (%p233) target = $region156
    $region153: #{blanknet_forward.1} parent=148 // loop_body
      %v239 = vld [vmem:[%s237] sm:%s230]
      %240 = vst [vmem:[%s238] sm:%s230] %v239
    $region154: #{blanknet_forward.1} parent=148 // loop_footer
      %s236 = sadd.s32 1, %s232
    $region155: #{blanknet_forward.1} parent=148 // loop_footer_branch
      %231 = sbr.rel target = $region151
    $region156: #{blanknet_forward.1} parent=148 // loop_exit
      _
  $region149: #{blanknet_forward.1} parent=0 // pred_fallthru
    _
  // Predicated region
  $region168: #{blanknet_forward.1} parent=0 // pred_check
    _
  $region169: #{blanknet_forward.1} parent=0 // pred_check_branch
    %264 = sbr.rel (0) target = $region171
  $region170: #{blanknet_forward.1} parent=0 // pred_region
    %265 = vsyncadd %s221, 16
  $region171: #{blanknet_forward.1} parent=0 // pred_fallthru
    _
  %s266 = sld [smem:[#allocation5 + $0x5]]
  %s267 = scalar_lea.vmem %s1, %s266
  %s268 = scalar_lea.vmem [#allocation2], 6
  %s269 = scalar_lea.sflag [#allocation3], 5
  %p271 = scmp.lt.u32.totalorder 1, 8
  %p272 = pneg %p271
  // Predicated region
  $region172: #{blanknet_forward.1} parent=0 // pred_check
    _
  $region173: #{blanknet_forward.1} parent=0 // pred_check_branch
    %274 = sbr.rel (%p271) target = $region175
  $region174: #{blanknet_forward.1} parent=0 // pred_region
    %s289 = sand.u32 1, 7
    %p290 = scmp.eq.s32.totalorder %s289, 0
    %p291 = pneg %p290
    // Predicated region
    $region187: #{blanknet_forward.1} parent=174 // pred_check
      _
    $region188: #{blanknet_forward.1} parent=174 // pred_check_branch
      %293 = sbr.rel (%p290) target = $region190
    $region189: #{blanknet_forward.1} parent=174 // pred_region
      %s294 = sand.u32 1, 7
      %s295 = ssub.s32 1, %s294
      %s296 = scalar_lea.vmem %s267, %s295
      %s297 = ssub.s32 1, %s294
      %s298 = scalar_lea.vmem %s268, %s297 [#allocation2]
      %s299 = sshllo.u32 0, %s294
      loop: start=0, step=1, limit=1
      $region191: #{blanknet_forward.1} parent=189 // loop_pre_header
        _
      $region192: #{blanknet_forward.1} parent=189 // loop_header
        %s301 = sphi 0, %s305
        %p302 = scmp.ge.s32.totalorder %s301, 1
        %s306 = sphi %s296, %s296
        %s307 = sphi %s298, %s298
      $region193: #{blanknet_forward.1} parent=189 // loop_header_branch
        %304 = sbr.rel (%p302) target = $region197
      $region194: #{blanknet_forward.1} parent=189 // loop_body
        %v308 = vld [vmem:[%s306] sm:%s299]
        %309 = vst [vmem:[%s307] sm:%s299] %v308
      $region195: #{blanknet_forward.1} parent=189 // loop_footer
        %s305 = sadd.s32 1, %s301
      $region196: #{blanknet_forward.1} parent=189 // loop_footer_branch
        %300 = sbr.rel target = $region192
      $region197: #{blanknet_forward.1} parent=189 // loop_exit
        _
    $region190: #{blanknet_forward.1} parent=174 // pred_fallthru
      _
  $region175: #{blanknet_forward.1} parent=0 // pred_fallthru
    _
  // Predicated region
  $region176: #{blanknet_forward.1} parent=0 // pred_check
    %p275 = pneg %p271
  $region177: #{blanknet_forward.1} parent=0 // pred_check_branch
    %277 = sbr.rel (%p275) target = $region179
  $region178: #{blanknet_forward.1} parent=0 // pred_region
    %s278 = sshllo.u32 0, 1
    loop: start=0, step=1, limit=1
    $region180: #{blanknet_forward.1} parent=178 // loop_pre_header
      _
    $region181: #{blanknet_forward.1} parent=178 // loop_header
      %s280 = sphi 0, %s284
      %p281 = scmp.ge.s32.totalorder %s280, 1
      %s285 = sphi %s267, %s267
      %s286 = sphi %s268, %s268
    $region182: #{blanknet_forward.1} parent=178 // loop_header_branch
      %283 = sbr.rel (%p281) target = $region186
    $region183: #{blanknet_forward.1} parent=178 // loop_body
      %v287 = vld [vmem:[%s285] sm:%s278]
      %288 = vst [vmem:[%s286] sm:%s278] %v287
    $region184: #{blanknet_forward.1} parent=178 // loop_footer
      %s284 = sadd.s32 1, %s280
    $region185: #{blanknet_forward.1} parent=178 // loop_footer_branch
      %279 = sbr.rel target = $region181
    $region186: #{blanknet_forward.1} parent=178 // loop_exit
      _
  $region179: #{blanknet_forward.1} parent=0 // pred_fallthru
    _
  // Predicated region
  $region198: #{blanknet_forward.1} parent=0 // pred_check
    _
  $region199: #{blanknet_forward.1} parent=0 // pred_check_branch
    %312 = sbr.rel (0) target = $region201
  $region200: #{blanknet_forward.1} parent=0 // pred_region
    %313 = vsyncadd %s269, 16
  $region201: #{blanknet_forward.1} parent=0 // pred_fallthru
    _
  %s314 = sld [smem:[#allocation5 + $0x6]]
  %s315 = scalar_lea.vmem %s1, %s314
  %s316 = scalar_lea.vmem [#allocation2], 3
  %s317 = scalar_lea.sflag [#allocation3], 6
  %p319 = scmp.lt.u32.totalorder 1, 8
  %p320 = pneg %p319
  // Predicated region
  $region202: #{blanknet_forward.1} parent=0 // pred_check
    _
  $region203: #{blanknet_forward.1} parent=0 // pred_check_branch
    %322 = sbr.rel (%p319) target = $region205
  $region204: #{blanknet_forward.1} parent=0 // pred_region
    %s337 = sand.u32 1, 7
    %p338 = scmp.eq.s32.totalorder %s337, 0
    %p339 = pneg %p338
    // Predicated region
    $region217: #{blanknet_forward.1} parent=204 // pred_check
      _
    $region218: #{blanknet_forward.1} parent=204 // pred_check_branch
      %341 = sbr.rel (%p338) target = $region220
    $region219: #{blanknet_forward.1} parent=204 // pred_region
      %s342 = sand.u32 1, 7
      %s343 = ssub.s32 1, %s342
      %s344 = scalar_lea.vmem %s315, %s343
      %s345 = ssub.s32 1, %s342
      %s346 = scalar_lea.vmem %s316, %s345 [#allocation2]
      %s347 = sshllo.u32 0, %s342
      loop: start=0, step=1, limit=1
      $region221: #{blanknet_forward.1} parent=219 // loop_pre_header
        _
      $region222: #{blanknet_forward.1} parent=219 // loop_header
        %s349 = sphi 0, %s353
        %p350 = scmp.ge.s32.totalorder %s349, 1
        %s354 = sphi %s344, %s344
        %s355 = sphi %s346, %s346
      $region223: #{blanknet_forward.1} parent=219 // loop_header_branch
        %352 = sbr.rel (%p350) target = $region227
      $region224: #{blanknet_forward.1} parent=219 // loop_body
        %v356 = vld [vmem:[%s354] sm:%s347]
        %357 = vst [vmem:[%s355] sm:%s347] %v356
      $region225: #{blanknet_forward.1} parent=219 // loop_footer
        %s353 = sadd.s32 1, %s349
      $region226: #{blanknet_forward.1} parent=219 // loop_footer_branch
        %348 = sbr.rel target = $region222
      $region227: #{blanknet_forward.1} parent=219 // loop_exit
        _
    $region220: #{blanknet_forward.1} parent=204 // pred_fallthru
      _
  $region205: #{blanknet_forward.1} parent=0 // pred_fallthru
    _
  // Predicated region
  $region206: #{blanknet_forward.1} parent=0 // pred_check
    %p323 = pneg %p319
  $region207: #{blanknet_forward.1} parent=0 // pred_check_branch
    %325 = sbr.rel (%p323) target = $region209
  $region208: #{blanknet_forward.1} parent=0 // pred_region
    %s326 = sshllo.u32 0, 1
    loop: start=0, step=1, limit=1
    $region210: #{blanknet_forward.1} parent=208 // loop_pre_header
      _
    $region211: #{blanknet_forward.1} parent=208 // loop_header
      %s328 = sphi 0, %s332
      %p329 = scmp.ge.s32.totalorder %s328, 1
      %s333 = sphi %s315, %s315
      %s334 = sphi %s316, %s316
    $region212: #{blanknet_forward.1} parent=208 // loop_header_branch
      %331 = sbr.rel (%p329) target = $region216
    $region213: #{blanknet_forward.1} parent=208 // loop_body
      %v335 = vld [vmem:[%s333] sm:%s326]
      %336 = vst [vmem:[%s334] sm:%s326] %v335
    $region214: #{blanknet_forward.1} parent=208 // loop_footer
      %s332 = sadd.s32 1, %s328
    $region215: #{blanknet_forward.1} parent=208 // loop_footer_branch
      %327 = sbr.rel target = $region211
    $region216: #{blanknet_forward.1} parent=208 // loop_exit
      _
  $region209: #{blanknet_forward.1} parent=0 // pred_fallthru
    _
  // Predicated region
  $region228: #{blanknet_forward.1} parent=0 // pred_check
    _
  $region229: #{blanknet_forward.1} parent=0 // pred_check_branch
    %360 = sbr.rel (0) target = $region231
  $region230: #{blanknet_forward.1} parent=0 // pred_region
    %361 = vsyncadd %s317, 16
  $region231: #{blanknet_forward.1} parent=0 // pred_fallthru
    _
  %s362 = sld [smem:[#allocation5 + $0x7]]
  %s363 = scalar_lea.vmem %s1, %s362
  %s364 = scalar_lea.vmem [#allocation2], 7
  %s365 = scalar_lea.sflag [#allocation3], 7
  %p367 = scmp.lt.u32.totalorder 1, 8
  %p368 = pneg %p367
  // Predicated region
  $region232: #{blanknet_forward.1} parent=0 // pred_check
    _
  $region233: #{blanknet_forward.1} parent=0 // pred_check_branch
    %370 = sbr.rel (%p367) target = $region235
  $region234: #{blanknet_forward.1} parent=0 // pred_region
    %s385 = sand.u32 1, 7
    %p386 = scmp.eq.s32.totalorder %s385, 0
    %p387 = pneg %p386
    // Predicated region
    $region247: #{blanknet_forward.1} parent=234 // pred_check
      _
    $region248: #{blanknet_forward.1} parent=234 // pred_check_branch
      %389 = sbr.rel (%p386) target = $region250
    $region249: #{blanknet_forward.1} parent=234 // pred_region
      %s390 = sand.u32 1, 7
      %s391 = ssub.s32 1, %s390
      %s392 = scalar_lea.vmem %s363, %s391
      %s393 = ssub.s32 1, %s390
      %s394 = scalar_lea.vmem %s364, %s393 [#allocation2]
      %s395 = sshllo.u32 0, %s390
      loop: start=0, step=1, limit=1
      $region251: #{blanknet_forward.1} parent=249 // loop_pre_header
        _
      $region252: #{blanknet_forward.1} parent=249 // loop_header
        %s397 = sphi 0, %s401
        %p398 = scmp.ge.s32.totalorder %s397, 1
        %s402 = sphi %s392, %s392
        %s403 = sphi %s394, %s394
      $region253: #{blanknet_forward.1} parent=249 // loop_header_branch
        %400 = sbr.rel (%p398) target = $region257
      $region254: #{blanknet_forward.1} parent=249 // loop_body
        %v404 = vld [vmem:[%s402] sm:%s395]
        %405 = vst [vmem:[%s403] sm:%s395] %v404
      $region255: #{blanknet_forward.1} parent=249 // loop_footer
        %s401 = sadd.s32 1, %s397
      $region256: #{blanknet_forward.1} parent=249 // loop_footer_branch
        %396 = sbr.rel target = $region252
      $region257: #{blanknet_forward.1} parent=249 // loop_exit
        _
    $region250: #{blanknet_forward.1} parent=234 // pred_fallthru
      _
  $region235: #{blanknet_forward.1} parent=0 // pred_fallthru
    _
  // Predicated region
  $region236: #{blanknet_forward.1} parent=0 // pred_check
    %p371 = pneg %p367
  $region237: #{blanknet_forward.1} parent=0 // pred_check_branch
    %373 = sbr.rel (%p371) target = $region239
  $region238: #{blanknet_forward.1} parent=0 // pred_region
    %s374 = sshllo.u32 0, 1
    loop: start=0, step=1, limit=1
    $region240: #{blanknet_forward.1} parent=238 // loop_pre_header
      _
    $region241: #{blanknet_forward.1} parent=238 // loop_header
      %s376 = sphi 0, %s380
      %p377 = scmp.ge.s32.totalorder %s376, 1
      %s381 = sphi %s363, %s363
      %s382 = sphi %s364, %s364
    $region242: #{blanknet_forward.1} parent=238 // loop_header_branch
      %379 = sbr.rel (%p377) target = $region246
    $region243: #{blanknet_forward.1} parent=238 // loop_body
      %v383 = vld [vmem:[%s381] sm:%s374]
      %384 = vst [vmem:[%s382] sm:%s374] %v383
    $region244: #{blanknet_forward.1} parent=238 // loop_footer
      %s380 = sadd.s32 1, %s376
    $region245: #{blanknet_forward.1} parent=238 // loop_footer_branch
      %375 = sbr.rel target = $region241
    $region246: #{blanknet_forward.1} parent=238 // loop_exit
      _
  $region239: #{blanknet_forward.1} parent=0 // pred_fallthru
    _
  // Predicated region
  $region258: #{blanknet_forward.1} parent=0 // pred_check
    _
  $region259: #{blanknet_forward.1} parent=0 // pred_check_branch
    %408 = sbr.rel (0) target = $region261
  $region260: #{blanknet_forward.1} parent=0 // pred_region
    %409 = vsyncadd %s365, 16
  $region261: #{blanknet_forward.1} parent=0 // pred_fallthru
    _
  %s410 = smul.u32 1, 1
  %s411 = sshll.u32 %s410, 4
  %412 = dma.done [#allocation3], %s411
  %s413 = sshll.u32 %s410, 4
  %414 = dma.done %s77, %s413
  %s415 = sshll.u32 %s410, 4
  %416 = dma.done %s125, %s415
  %s417 = sshll.u32 %s410, 4
  %418 = dma.done %s173, %s417
  %s419 = sshll.u32 %s410, 4
  %420 = dma.done %s221, %s419
  %s421 = sshll.u32 %s410, 4
  %422 = dma.done %s269, %s421
  %s423 = sshll.u32 %s410, 4
  %424 = dma.done %s317, %s423
  %s425 = sshll.u32 %s410, 4
  %426 = dma.done %s365, %s425
  %v427 = vld [vmem:[#allocation2] sm:$0xff]
  %v428 = vld [vmem:[%s2] sm:$0xff]
  %v429 = vld [vmem:[%s2 + $0x8] sm:$0xff]
  %v430 = vld [vmem:[%s2 + $0x10] sm:$0xff]
  %v431 = vld [vmem:[%s2 + $0x18] sm:$0xff]
  %v432 = vld [vmem:[%s2 + $0x20] sm:$0xff]
  %v433 = vld [vmem:[%s2 + $0x28] sm:$0xff]
  %v434 = vld [vmem:[%s2 + $0x30] sm:$0xff]
  %v435 = vld [vmem:[%s2 + $0x38] sm:$0xff]
  %v436 = vld [vmem:[%s2 + $0x40] sm:$0xff]
  %v437 = vld [vmem:[%s2 + $0x48] sm:$0xff]
  %v438 = vld [vmem:[%s2 + $0x50] sm:$0xff]
  %v439 = vld [vmem:[%s2 + $0x58] sm:$0xff]
  %v440 = vld [vmem:[%s2 + $0x60] sm:$0xff]
  %v441 = vld [vmem:[%s2 + $0x68] sm:$0xff]
  %v442 = vld [vmem:[%s2 + $0x70] sm:$0xff]
  %v443 = vld [vmem:[%s2 + $0x78] sm:$0xff]
  %v444 = vld [vmem:[%s2 + $0x80] sm:$0xff]
  %v445 = vld [vmem:[%s2 + $0x88] sm:$0xff]
  %v446 = vld [vmem:[%s2 + $0x90] sm:$0xff]
  %v447 = vld [vmem:[%s2 + $0x98] sm:$0xff]
  %v448 = vld [vmem:[%s2 + $0xa0] sm:$0xff]
  %v449 = vld [vmem:[%s2 + $0xa8] sm:$0xff]
  %v450 = vld [vmem:[%s2 + $0xb0] sm:$0xff]
  %v451 = vld [vmem:[%s2 + $0xb8] sm:$0xff]
  %v452 = vld [vmem:[%s2 + $0xc0] sm:$0xff]
  %v453 = vld [vmem:[%s2 + $0xc8] sm:$0xff]
  %v454 = vld [vmem:[%s2 + $0xd0] sm:$0xff]
  %v455 = vld [vmem:[%s2 + $0xd8] sm:$0xff]
  %v456 = vld [vmem:[%s2 + $0xe0] sm:$0xff]
  %v457 = vld [vmem:[%s2 + $0xe8] sm:$0xff]
  %v458 = vld [vmem:[%s2 + $0xf0] sm:$0xff]
  %v459 = vld [vmem:[%s2 + $0xf8] sm:$0xff]
  %v460 = vld [vmem:[%s3] sm:$0x1]
  %v462 = vlaneseq
  %v463 = vshrl.u32 %v462, 7
  %v464 = vsub.s32 0, %v463
  %v465 = vrot.slane %v460, %v464
  %v468 = vcombine.high %v427, %v427
  %470 = vmatprep.subr.mxu0 0.0
  %471 = vmatpush1.msra.mxu0 %v428
  %472 = vmatprep.subr.mxu0 0.0
  %473 = vmatpush1.msra.mxu0 %v429
  %474 = vmatprep.subr.mxu0 0.0
  %475 = vmatpush1.msra.mxu0 %v430
  %476 = vmatprep.subr.mxu0 0.0
  %477 = vmatpush1.msra.mxu0 %v431
  %478 = vmatprep.subr.mxu0 0.0
  %479 = vmatpush1.msra.mxu0 %v432
  %480 = vmatprep.subr.mxu0 0.0
  %481 = vmatpush1.msra.mxu0 %v433
  %482 = vmatprep.subr.mxu0 0.0
  %483 = vmatpush1.msra.mxu0 %v434
  %484 = vmatprep.subr.mxu0 0.0
  %485 = vmatpush1.msra.mxu0 %v435
  %486 = vmatprep.subr.mxu0 0.0
  %487 = vmatpush1.msra.mxu0 %v436
  %488 = vmatprep.subr.mxu0 0.0
  %489 = vmatpush1.msra.mxu0 %v437
  %490 = vmatprep.subr.mxu0 0.0
  %491 = vmatpush1.msra.mxu0 %v438
  %492 = vmatprep.subr.mxu0 0.0
  %493 = vmatpush1.msra.mxu0 %v439
  %494 = vmatprep.subr.mxu0 0.0
  %495 = vmatpush1.msra.mxu0 %v440
  %496 = vmatprep.subr.mxu0 0.0
  %497 = vmatpush1.msra.mxu0 %v441
  %498 = vmatprep.subr.mxu0 0.0
  %499 = vmatpush1.msra.mxu0 %v442
  %500 = vmatprep.subr.mxu0 0.0
  %501 = vmatpush1.msra.mxu0 %v443
  %502 = vmatprep.subr.mxu0 0.0
  %503 = vmatpush1.msra.mxu0 %v444
  %504 = vmatprep.subr.mxu0 0.0
  %505 = vmatpush1.msra.mxu0 %v445
  %506 = vmatprep.subr.mxu0 0.0
  %507 = vmatpush1.msra.mxu0 %v446
  %508 = vmatprep.subr.mxu0 0.0
  %509 = vmatpush1.msra.mxu0 %v447
  %510 = vmatprep.subr.mxu0 0.0
  %511 = vmatpush1.msra.mxu0 %v448
  %512 = vmatprep.subr.mxu0 0.0
  %513 = vmatpush1.msra.mxu0 %v449
  %514 = vmatprep.subr.mxu0 0.0
  %515 = vmatpush1.msra.mxu0 %v450
  %516 = vmatprep.subr.mxu0 0.0
  %517 = vmatpush1.msra.mxu0 %v451
  %518 = vmatprep.subr.mxu0 0.0
  %519 = vmatpush1.msra.mxu0 %v452
  %520 = vmatprep.subr.mxu0 0.0
  %521 = vmatpush1.msra.mxu0 %v453
  %522 = vmatprep.subr.mxu0 0.0
  %523 = vmatpush1.msra.mxu0 %v454
  %524 = vmatprep.subr.mxu0 0.0
  %525 = vmatpush1.msra.mxu0 %v455
  %526 = vmatprep.subr.mxu0 0.0
  %527 = vmatpush1.msra.mxu0 %v456
  %528 = vmatprep.subr.mxu0 0.0
  %529 = vmatpush1.msra.mxu0 %v457
  %530 = vmatprep.subr.mxu0 0.0
  %531 = vmatpush1.msra.mxu0 %v458
  %532 = vmatprep.subr.mxu0 0.0
  %533 = vmatpush1.msra.mxu0 %v459
  %534 = vmatprep.mubr.f32.mxu0 %v468
  %535 = vmatmul.mubr.f32.gmra.mrb[0].mxu0 %v427
  %v536 = vpop.f32.mrb[0].mxu0
  %v537 = vadd.f32 %v465, %v536
  %v538 = vpop.f32.mrb[0].mxu0
  %539 = vdwg.mxu0
  %v540 = vmax.f32 %v537, 0.0
  %v541 = vld [vmem:[%s4] sm:$0xff]
  %v542 = vld [vmem:[%s4 + $0x8] sm:$0xff]
  %v543 = vld [vmem:[%s4 + $0x10] sm:$0xff]
  %v544 = vld [vmem:[%s4 + $0x18] sm:$0xff]
  %v545 = vld [vmem:[%s4 + $0x20] sm:$0xff]
  %v546 = vld [vmem:[%s4 + $0x28] sm:$0xff]
  %v547 = vld [vmem:[%s4 + $0x30] sm:$0xff]
  %v548 = vld [vmem:[%s4 + $0x38] sm:$0xff]
  %v549 = vld [vmem:[%s4 + $0x40] sm:$0xff]
  %v550 = vld [vmem:[%s4 + $0x48] sm:$0xff]
  %v551 = vld [vmem:[%s4 + $0x50] sm:$0xff]
  %v552 = vld [vmem:[%s4 + $0x58] sm:$0xff]
  %v553 = vld [vmem:[%s4 + $0x60] sm:$0xff]
  %v554 = vld [vmem:[%s4 + $0x68] sm:$0xff]
  %v555 = vld [vmem:[%s4 + $0x70] sm:$0xff]
  %v556 = vld [vmem:[%s4 + $0x78] sm:$0xff]
  %v557 = vld [vmem:[%s5] sm:$0x1]
  %v559 = vlaneseq
  %v560 = vshrl.u32 %v559, 7
  %v561 = vsub.s32 0, %v560
  %v562 = vrot.slane %v557, %v561
  %564 = vmatprep.subr.mxu0 0.0
  %565 = vmatpush1.msra.mxu0 %v541
  %566 = vmatprep.subr.mxu0 0.0
  %567 = vmatpush1.msra.mxu0 %v542
  %568 = vmatprep.subr.mxu0 0.0
  %569 = vmatpush1.msra.mxu0 %v543
  %570 = vmatprep.subr.mxu0 0.0
  %571 = vmatpush1.msra.mxu0 %v544
  %572 = vmatprep.subr.mxu0 0.0
  %573 = vmatpush1.msra.mxu0 %v545
  %574 = vmatprep.subr.mxu0 0.0
  %575 = vmatpush1.msra.mxu0 %v546
  %576 = vmatprep.subr.mxu0 0.0
  %577 = vmatpush1.msra.mxu0 %v547
  %578 = vmatprep.subr.mxu0 0.0
  %579 = vmatpush1.msra.mxu0 %v548
  %580 = vmatprep.subr.mxu0 0.0
  %581 = vmatpush1.msra.mxu0 %v549
  %582 = vmatprep.subr.mxu0 0.0
  %583 = vmatpush1.msra.mxu0 %v550
  %584 = vmatprep.subr.mxu0 0.0
  %585 = vmatpush1.msra.mxu0 %v551
  %586 = vmatprep.subr.mxu0 0.0
  %587 = vmatpush1.msra.mxu0 %v552
  %588 = vmatprep.subr.mxu0 0.0
  %589 = vmatpush1.msra.mxu0 %v553
  %590 = vmatprep.subr.mxu0 0.0
  %591 = vmatpush1.msra.mxu0 %v554
  %592 = vmatprep.subr.mxu0 0.0
  %593 = vmatpush1.msra.mxu0 %v555
  %594 = vmatprep.subr.mxu0 0.0
  %595 = vmatpush1.msra.mxu0 %v556
  %596 = vmatprep.subr.mxu0 0.0
  %597 = vmatpush1.msra.mxu0 0.0
  %598 = vmatprep.subr.mxu0 0.0
  %599 = vmatpush1.msra.mxu0 0.0
  %600 = vmatprep.subr.mxu0 0.0
  %601 = vmatpush1.msra.mxu0 0.0
  %602 = vmatprep.subr.mxu0 0.0
  %603 = vmatpush1.msra.mxu0 0.0
  %604 = vmatprep.subr.mxu0 0.0
  %605 = vmatpush1.msra.mxu0 0.0
  %606 = vmatprep.subr.mxu0 0.0
  %607 = vmatpush1.msra.mxu0 0.0
  %608 = vmatprep.subr.mxu0 0.0
  %609 = vmatpush1.msra.mxu0 0.0
  %610 = vmatprep.subr.mxu0 0.0
  %611 = vmatpush1.msra.mxu0 0.0
  %612 = vmatprep.subr.mxu0 0.0
  %613 = vmatpush1.msra.mxu0 0.0
  %614 = vmatprep.subr.mxu0 0.0
  %615 = vmatpush1.msra.mxu0 0.0
  %616 = vmatprep.subr.mxu0 0.0
  %617 = vmatpush1.msra.mxu0 0.0
  %618 = vmatprep.subr.mxu0 0.0
  %619 = vmatpush1.msra.mxu0 0.0
  %620 = vmatprep.subr.mxu0 0.0
  %621 = vmatpush1.msra.mxu0 0.0
  %622 = vmatprep.subr.mxu0 0.0
  %623 = vmatpush1.msra.mxu0 0.0
  %624 = vmatprep.subr.mxu0 0.0
  %625 = vmatpush1.msra.mxu0 0.0
  %626 = vmatprep.subr.mxu0 0.0
  %627 = vmatpush1.msra.mxu0 0.0
  %628 = vmatprep.mubr.f32.mxu0 0.0
  %629 = vmatmul.mubr.f32.gmra.mrb[0].mxu0 %v540
  %v630 = vpop.f32.mrb[0].mxu0
  %v631 = vadd.f32 %v562, %v630
  %v632 = vpop.f32.mrb[0].mxu0
  %633 = vdwg.mxu0
  %v634 = vsub.f32 0.0, %v631
  %v635 = vmul.f32 %v634, 1.442695
  %v636 = vpow.pop %v635
  %v637 = vadd.f32 %v636, 1.0
  %v638 = vrcp.pop %v637
  %v639 = vmul.f32 1.0, %v638
  %v640 = vld [vmem:[%s6] sm:$0xf]
  %v641 = vmax.f32 %v631, 0.0
  %v642 = vmul.f32 %v631, %v640
  %v643 = vsub.f32 %v641, %v642
  %v644 = vand.u32 2147483647, %v631
  %v645 = vsub.f32 0.0, %v644
  %v646 = vmul.f32 %v645, 1.442695
  %v647 = vpow.pop %v646
  %v648 = vadd.f32 %v647, 1.0
  %v649 = vlog2.pop %v648
  %v650 = vmul.f32 %v649, 0.6931472
  %v651 = vmul.f32 -0.5, %v647
  %v652 = vadd.f32 %v651, 1.0
  %v653 = vmul.f32 %v652, %v647
  %v654 = vand.u32 2147483647, %v647
  %vm655 = vcmp.lt.f32.partialorder %v654, 0.0004427343
  %v656 = vsel %vm655, %v653, %v650
  %v657 = vadd.f32 %v643, %v656
  %v658 = vlaneseq
  %v659 = vand.u32 %v658, 127
  %vm660 = vcmp.lt.s32.totalorder %v659, 8
  %v661 = vsel %vm660, 1, 0
  %v662 = vcvt.s32.f32 %v661
  %vm663 = vcmp.ge.s32.totalorder %v659, 8
  %vm664 = vcmp.lt.s32.totalorder %v659, 16
  %vm665 = vmand %vm663, %vm664
  %v666 = vsel %vm665, 1, 0
  %v667 = vcvt.s32.f32 %v666
  %v668 = vmul.f32 %v657, %v662
  %vm669 = vcmask 1043456
  %v670 = vsel %vm669, %v668, 0.0
  %671 = vadd.xlane.f32.xlu0 %v670
  %v672 = vpop.xlane.xlu0 %671
  %v673 = vrot.slane %v672, 4
  %v674 = vadd.f32 %v672, %v673
  %v675 = vrot.slane %v674, 2
  %v676 = vadd.f32 %v674, %v675
  %v677 = vrot.slane %v676, 1
  %v678 = vadd.f32 %v676, %v677
  %s679 = vtos %v678
  %s680 = smul.f32 %s679, 0.03125
  %vm681 = vcmp.eq.f32.partialorder %v640, 1.0
  %v682 = vsel %vm681, 1, 0
  %v683 = vcvt.s32.f32 %v682
  %685 = vrot.lane.b32.xlu0 %v683, 126
  %v686 = vpop.permute.xlu0 %685
  %vm688 = vcmask 3072
  %v689 = vsel %vm688, %v686, 0.0
  %690 = vadd.xlane.f32.xlu0 %v689
  %v691 = vpop.xlane.xlu0 %690
  %v692 = vrot.slane %v691, 4
  %v693 = vadd.f32 %v691, %v692
  %v694 = vrot.slane %v693, 2
  %v695 = vadd.f32 %v693, %v694
  %v696 = vrot.slane %v695, 1
  %v697 = vadd.f32 %v695, %v696
  %s698 = vtos %v697
  %v699 = vmul.f32 %v657, %v667
  %700 = vset.pattern.permute.xlu0 2
  %701 = vperm.xlu0 %700, %v683
  %v702 = vpop.permute.xlu0 %701
  %v704 = vmul.f32 %v699, %v702
  %v705 = vsel %vm669, %v704, 0.0
  %706 = vadd.xlane.f32.xlu0 %v705
  %v707 = vpop.xlane.xlu0 %706
  %v708 = vrot.slane %v707, 4
  %v709 = vadd.f32 %v707, %v708
  %v710 = vrot.slane %v709, 2
  %v711 = vadd.f32 %v709, %v710
  %v712 = vrot.slane %v711, 1
  %v713 = vadd.f32 %v711, %v712
  %s714 = vtos %v713
  %p715 = scmp.gt.f32.partialorder %s698, 0.0
  %s716 = smul.f32 %s698, 8.0
  %v717 = vstv %s716
  %v718 = vrcp.pop %v717
  %s719 = vtos %v718
  %s720 = smul.f32 %s714, %s719
  %s721 = scalar_select %p715, %s720, 0.0
  %v722 = vlaneseq
  %v723 = vshrl.u32 %v722, 7
  %vm724 = vcmp.eq.s32.totalorder %v723, 0
  %vm725 = vcmp.eq.s32.totalorder %v659, 16
  %vm726 = vmand %vm724, %vm725
  %v727 = vstv %s680
  %v728 = vsel %vm726, %v727, %v639
  %vm729 = vcmp.eq.s32.totalorder %v659, 17
  %vm730 = vmand %vm724, %vm729
  %v731 = vstv %s721
  %v732 = vsel %vm730, %v731, %v728
  %733 = vst [vmem:[%s7] sm:$0xf] %v732
  // Predicated region
  $region262: #{blanknet_forward.1} parent=0 // pred_check
    _
  $region263: #{blanknet_forward.1} parent=0 // pred_check_branch
    %735 = sbr.rel (0) target = $region265
  $region264: #{blanknet_forward.1} parent=0 // pred_region
    _
  $region265: #{blanknet_forward.1} parent=0 // pred_fallthru
    _
  // Predicated region
  $region266: #{blanknet_forward.1} parent=0 // pred_check
    _
  $region267: #{blanknet_forward.1} parent=0 // pred_check_branch
    %737 = sbr.rel (0) target = $region269
  $region268: #{blanknet_forward.1} parent=0 // pred_region
    _
  $region269: #{blanknet_forward.1} parent=0 // pred_fallthru
    _
  %738 = vsyncmov [#allocation3]
  %s739 = vpop.sfrf %738
  %p740 = scmp.eq.s32.totalorder %s739, 0
  %p741 = pneg %p740
  %743 = shalt.err (%p741)
  %s744 = scalar_lea.sflag [#allocation3], 1
  %745 = vsyncmov %s744
  %s746 = vpop.sfrf %745
  %p747 = scmp.eq.s32.totalorder %s746, 0
  %p748 = pneg %p747
  %750 = shalt.err (%p748)
  %s751 = scalar_lea.sflag [#allocation3], 2
  %752 = vsyncmov %s751
  %s753 = vpop.sfrf %752
  %p754 = scmp.eq.s32.totalorder %s753, 0
  %p755 = pneg %p754
  %757 = shalt.err (%p755)
  %s758 = scalar_lea.sflag [#allocation3], 3
  %759 = vsyncmov %s758
  %s760 = vpop.sfrf %759
  %p761 = scmp.eq.s32.totalorder %s760, 0
  %p762 = pneg %p761
  %764 = shalt.err (%p762)
  %s765 = scalar_lea.sflag [#allocation3], 4
  %766 = vsyncmov %s765
  %s767 = vpop.sfrf %766
  %p768 = scmp.eq.s32.totalorder %s767, 0
  %p769 = pneg %p768
  %771 = shalt.err (%p769)
  %s772 = scalar_lea.sflag [#allocation3], 5
  %773 = vsyncmov %s772
  %s774 = vpop.sfrf %773
  %p775 = scmp.eq.s32.totalorder %s774, 0
  %p776 = pneg %p775
  %778 = shalt.err (%p776)
  %s779 = scalar_lea.sflag [#allocation3], 6
  %780 = vsyncmov %s779
  %s781 = vpop.sfrf %780
  %p782 = scmp.eq.s32.totalorder %s781, 0
  %p783 = pneg %p782
  %785 = shalt.err (%p783)
  %s786 = scalar_lea.sflag [#allocation3], 7
  %787 = vsyncmov %s786
  %s788 = vpop.sfrf %787
  %p789 = scmp.eq.s32.totalorder %s788, 0
  %p790 = pneg %p789
  %792 = shalt.err (%p790)

</llo_original>
